<compile_context>
chip_gen: v7x
topology: tpu7x:2x2x1
jax: 0.10.0
libtpu: 0.0.40
codegen_flags: <defaults>
</compile_context>

<pallas_src>
import math
import functools

import jax
import jax.numpy as jnp
from jax import lax
from jax.experimental import pallas as pl
from jax.experimental.pallas import tpu as pltpu


# ---------------------------------------------------------------------------
# In-kernel helpers: row-wise cyclic shifts (skew / unskew) as a log-depth
# butterfly of static lane rolls + per-row selects (no per-row loops).
# ---------------------------------------------------------------------------

def _roll_lanes(x, shift):
    """np.roll along the last axis by a static amount (positive -> higher idx)."""
    n = x.shape[-1]
    shift = shift % n
    if shift == 0:
        return x
    return jnp.concatenate([x[..., n - shift:], x[..., :n - shift]], axis=-1)


def _shift_rows(x, *, left):
    """out[i, j] = x[i, (j + i) % n] if left else x[i, (j - i) % n]."""
    rows = x.shape[0]
    row = lax.broadcasted_iota(jnp.int32, (rows, 1), 0)
    sign = -1 if left else 1
    out = x
    for b in range(max(1, (rows - 1).bit_length())):
        s = 1 << b
        rolled = _roll_lanes(out, sign * s)
        out = jnp.where((row & s) != 0, rolled, out)
    return out


# ---------------------------------------------------------------------------
# Fused MultiHeadSeqAttention kernel (all heads per grid step)
# ---------------------------------------------------------------------------

def _mhsa_kernel(q_ref, k_ref, v_ref, wq_ref, wk_ref, wv_ref, wo_ref, pe_ref,
                 o_ref, oh_ref, *, nheads, head_dim, span, q_tile, scale):
    D, TQ = head_dim, q_tile
    W = TQ + span                                     # key rows this tile touches

    t = pl.program_id(1)
    qstart = pl.multiple_of(t * TQ, TQ)

    xq = q_ref[0]                                     # (TQ, H)
    xk = k_ref[0, pl.ds(qstart, W), :]                # (W, H)
    xv = v_ref[0, pl.ds(qstart, W), :]                # (W, H)

    wo = wo_ref[...].astype(jnp.float32)              # (K*D, H)
    pe = pe_ref[...].astype(jnp.float32)              # (D, span), shared by heads

    # Full-width projections over ALL heads: one MXU matmul each, f32 accumulate.
    # 1/sqrt(head_dim) folded into q (scales both content and position logits).
    q = jnp.dot(xq, wq_ref[...], preferred_element_type=jnp.float32) * scale  # (TQ, K*D)
    k = jnp.dot(xk, wk_ref[...], preferred_element_type=jnp.float32)          # (W,  K*D)
    v = jnp.dot(xv, wv_ref[...], preferred_element_type=jnp.float32)          # (W,  K*D)

    for h in range(nheads):                           # static unroll over heads
        lo, hi = h * D, (h + 1) * D
        q_h, k_h, v_h = q[:, lo:hi], k[:, lo:hi], v[:, lo:hi]

        # Content scores in slice-local absolute coordinates (no k transpose).
        s_abs = lax.dot_general(q_h, k_h, (((1,), (1,)), ((), ())),
                                preferred_element_type=jnp.float32)    # (TQ, W)

        # -> relative coordinates: s_rel[i, c] = s_abs[i, i + c], c in [0, span)
        s_rel = _shift_rows(s_abs, left=True)[:, :span]                # (TQ, span)

        # Position logits added directly in relative coordinates (no skew).
        logits = s_rel + jnp.dot(q_h, pe, preferred_element_type=jnp.float32)

        # Softmax over exactly `span` valid keys per row: no mask needed.
        m = jnp.max(logits, axis=-1, keepdims=True)
        e = jnp.exp(logits - m)
        denom = jnp.sum(e, axis=-1, keepdims=True)
        p = e * pl.reciprocal(denom, approx=True)                      # (TQ, span)

        # Skew probabilities back to absolute coordinates (zeros off the band;
        # the TQ-wide zero pad >= max row shift, so no values wrap around).
        p_pad = jnp.concatenate(
            [p, jnp.zeros((TQ, W - span), jnp.float32)], axis=-1)      # (TQ, W)
        p_abs = _shift_rows(p_pad, left=False)

        oh_ref[:, lo:hi] = jnp.dot(p_abs, v_h,
                                   preferred_element_type=jnp.float32)  # (TQ, D)

    # Single output projection over all heads: (TQ, K*D) @ (K*D, H).
    o_ref[0] = jnp.dot(oh_ref[...], wo,
                       preferred_element_type=jnp.float32).astype(o_ref.dtype)


# ---------------------------------------------------------------------------
# Wrapper
# ---------------------------------------------------------------------------

def _pick_q_tile(M):
    if M <= 256:
        return M
    for t in range(256, 0, -1):
        if M % t == 0 and t % 8 == 0:
            return t
    return M


def _vmem_limit_bytes():
    """~75% of physical VMEM (≈48 MiB v7x, ≈96 MiB v5e/v6e); safe fallback."""
    try:
        cap = int(pltpu.get_tpu_info().vmem_capacity_bytes)
    except Exception:
        cap = 64 * 1024 * 1024
    return max(32 * 1024 * 1024, (cap * 3) // 4)


@functools.partial(jax.jit, static_argnames=("nheads", "head_dim", "q_tile", "io_dtype"))
def multi_head_seq_attention(params, query, key, value, *, nheads, head_dim,
                             q_tile=None, io_dtype=None):
    """query: (B, M, H); key/value: (B, M + L, H) with L = key_pe.shape[-1]."""
    B, M, H = query.shape
    Lk = key.shape[1]
    KD = nheads * head_dim
    key_pe = params["key_pe"]                    # (1, D, span)
    span = key_pe.shape[-1]
    assert Lk == M + span, "key/value length must equal query length + attn span"
    assert value.shape == key.shape
    assert params["wq"].shape == (H, KD) and params["wo"].shape == (KD, H)

    TQ = _pick_q_tile(M) if q_tile is None else q_tile
    assert M % TQ == 0, "query length must be a multiple of the query tile"
    nqt = M // TQ

    # bf16 (or other) operands at the boundary: halves DMA bytes and resident
    # k/v VMEM; accumulation / softmax stay f32 inside the kernel.
    cast = (lambda a: a) if io_dtype is None else (lambda a: a.astype(io_dtype))
    query, key, value = cast(query), cast(key), cast(value)
    wq, wk, wv, wo = (cast(params["wq"]), cast(params["wk"]),
                      cast(params["wv"]), cast(params["wo"]))
    pe = cast(key_pe[0])                         # (D, span), shared across heads

    kernel = functools.partial(_mhsa_kernel, nheads=nheads, head_dim=head_dim,
                               span=span, q_tile=TQ,
                               scale=1.0 / math.sqrt(head_dim))

    return pl.pallas_call(
        kernel,
        out_shape=jax.ShapeDtypeStruct((B, M, H), query.dtype),
        grid=(B, nqt),
        in_specs=[
            pl.BlockSpec((1, TQ, H), lambda b, t: (b, t, 0)),   # query tile
            pl.BlockSpec((1, Lk, H), lambda b, t: (b, 0, 0)),   # key (resident over t)
            pl.BlockSpec((1, Lk, H), lambda b, t: (b, 0, 0)),   # value
            pl.BlockSpec((H, KD), lambda b, t: (0, 0)),         # Wq (all heads)
            pl.BlockSpec((H, KD), lambda b, t: (0, 0)),         # Wk
            pl.BlockSpec((H, KD), lambda b, t: (0, 0)),         # Wv
            pl.BlockSpec((KD, H), lambda b, t: (0, 0)),         # Wo
            pl.BlockSpec((head_dim, span), lambda b, t: (0, 0)),  # key_pe
        ],
        out_specs=pl.BlockSpec((1, TQ, H), lambda b, t: (b, t, 0)),
        scratch_shapes=[pltpu.VMEM((TQ, KD), jnp.float32)],     # per-head outputs
        compiler_params=pltpu.CompilerParams(
            dimension_semantics=("parallel", "parallel"),
            vmem_limit_bytes=_vmem_limit_bytes()),
    )(query, key, value, wq, wk, wv, wo, pe)


# ---------------------------------------------------------------------------
# Pure-JAX reference: literal translation of the torch forward (eval mode)
# ---------------------------------------------------------------------------

_HI = jax.lax.Precision.HIGHEST


def _skew_ref(X, pad_value):
    B, M, L = X.shape
    X = jnp.pad(X, ((0, 0), (0, 0), (0, M + 1)), constant_values=pad_value)
    X = X.reshape(B, -1)[:, :-M]
    return X.reshape(B, M, M + L)


def _unskew_ref(X):
    B, M, LM = X.shape
    L = LM - M
    X = X.reshape(B, -1)
    X = jnp.pad(X, ((0, 0), (0, M)))
    X = X.reshape(B, M, M + L + 1)
    return X[:, :, :L]


def reference(params, query, key, value, *, nheads, head_dim):
    B, M, H = query.shape
    K, D = nheads, head_dim

    def head_reshape(x):
        b, t, _ = x.shape
        return x.reshape(b, t, K, D).transpose(0, 2, 1, 3).reshape(b * K, t, D)

    q = head_reshape(jnp.matmul(query, params["wq"], precision=_HI))
    k = head_reshape(jnp.matmul(key, params["wk"], precision=_HI))
    v = head_reshape(jnp.matmul(value, params["wv"], precision=_HI))

    attn = jnp.matmul(q, jnp.swapaxes(k, -1, -2), precision=_HI)    # (BK, M, M+L)
    attn = _unskew_ref(attn)                                        # (BK, M, L)
    attn = attn + jnp.matmul(q, params["key_pe"], precision=_HI)    # (BK, M, L)
    attn = attn / math.sqrt(D)
    attn = jax.nn.softmax(attn, axis=-1)
    attn_cont = _skew_ref(attn, 0.0)                                # (BK, M, M+L)
    out = jnp.matmul(attn_cont, v, precision=_HI)                   # (BK, M, D)
    out = out.reshape(B, K, M, D).transpose(0, 2, 1, 3).reshape(B, M, K * D)
    return jnp.matmul(out, params["wo"], precision=_HI)


# ---------------------------------------------------------------------------
# Deterministic parameter init + driver
# ---------------------------------------------------------------------------

def init_params(key, *, hid_sz, nheads, head_dim, attn_span):
    H, KD = hid_sz, nheads * head_dim
    ks = jax.random.split(key, 5)

    def w(k, shape, scale):
        return jax.random.normal(k, shape, jnp.float32) * scale

    return {
        "wq": w(ks[0], (H, KD), 1.0 / math.sqrt(H)),
        "wk": w(ks[1], (H, KD), 1.0 / math.sqrt(H)),
        "wv": w(ks[2], (H, KD), 1.0 / math.sqrt(H)),
        "wo": w(ks[3], (KD, H), 1.0 / math.sqrt(KD)),
        "key_pe": w(ks[4], (1, head_dim, attn_span), 1.0 / math.sqrt(head_dim)),
    }


if __name__ == "__main__":
    B, M = 2, 8                          # batch, query block length
    hid_sz, nheads, head_dim = 32, 4, 8
    attn_span = 24                       # L = attn_lim; key/value length = M + L
    Lk = M + attn_span

    root = jax.random.PRNGKey(0)
    kp, kq, kc = jax.random.split(root, 3)
    params = init_params(kp, hid_sz=hid_sz, nheads=nheads, head_dim=head_dim,
                         attn_span=attn_span)
    query = jax.random.normal(kq, (B, M, hid_sz), jnp.float32)
    context = jax.random.normal(kc, (B, Lk, hid_sz), jnp.float32)

    out = multi_head_seq_attention(params, query, context, context,
                                   nheads=nheads, head_dim=head_dim)
    out = jax.block_until_ready(out)
    assert out.shape == (B, M, hid_sz)

    ref = reference(params, query, context, context,
                    nheads=nheads, head_dim=head_dim)
    max_diff = float(jnp.max(jnp.abs(out - ref)))
    assert bool(jnp.allclose(out, ref, atol=3e-2, rtol=3e-2)), \
        f"max abs diff {max_diff}"

    # bf16-at-the-boundary path (halves HBM->VMEM DMA and k/v VMEM; v6e/v7x).
    out_bf16 = multi_head_seq_attention(params, query, context, context,
                                        nheads=nheads, head_dim=head_dim,
                                        io_dtype=jnp.bfloat16)
    out_bf16 = jax.block_until_ready(out_bf16)
    assert out_bf16.shape == (B, M, hid_sz)
    assert bool(jnp.all(jnp.isfinite(out_bf16.astype(jnp.float32))))

    print("KERNEL_OK")
</pallas_src>

<mosaic_0001>
module attributes {stable_mosaic.version = 11 : i64} {
  func.func @_mhsa_kernel(%arg0: i32, %arg1: i32, %arg2: memref<1x8x32xf32, #tpu.memory_space<vmem>>, %arg3: memref<1x32x32xf32, #tpu.memory_space<vmem>>, %arg4: memref<1x32x32xf32, #tpu.memory_space<vmem>>, %arg5: memref<32x32xf32, #tpu.memory_space<vmem>>, %arg6: memref<32x32xf32, #tpu.memory_space<vmem>>, %arg7: memref<32x32xf32, #tpu.memory_space<vmem>>, %arg8: memref<32x32xf32, #tpu.memory_space<vmem>>, %arg9: memref<8x24xf32, #tpu.memory_space<vmem>>, %arg10: memref<1x8x32xf32, #tpu.memory_space<vmem>>, %arg11: memref<8x32xf32, #tpu.memory_space<vmem>>) attributes {dimension_semantics = [#tpu.dimension_semantics<parallel>, #tpu.dimension_semantics<parallel>], iteration_bounds = array<i64: 2, 1>, scalar_prefetch = 0 : i64, scratch_operands = 1 : i64, tpu.core_type = #tpu.core_type<tc>, window_params = [{transform_indices = @transform_0, window_bounds = array<i64: 1, 8, 32>}, {transform_indices = @transform_1, window_bounds = array<i64: 1, 32, 32>}, {transform_indices = @transform_2, window_bounds = array<i64: 1, 32, 32>}, {pipeline_mode = #tpu.pipeline_mode<synchronous>, transform_indices = @transform_3, window_bounds = array<i64: 32, 32>}, {pipeline_mode = #tpu.pipeline_mode<synchronous>, transform_indices = @transform_4, window_bounds = array<i64: 32, 32>}, {pipeline_mode = #tpu.pipeline_mode<synchronous>, transform_indices = @transform_5, window_bounds = array<i64: 32, 32>}, {pipeline_mode = #tpu.pipeline_mode<synchronous>, transform_indices = @transform_6, window_bounds = array<i64: 32, 32>}, {pipeline_mode = #tpu.pipeline_mode<synchronous>, transform_indices = @transform_7, window_bounds = array<i64: 8, 24>}, {transform_indices = @transform_8, window_bounds = array<i64: 1, 8, 32>}]} {
    %c8_i32 = arith.constant 8 : i32
    %0 = arith.muli %arg1, %c8_i32 : i32
    %1 = tpu.assume_multiple %0, 8 : i32
    %c0 = arith.constant 0 : index
    %c0_0 = arith.constant 0 : index
    %c0_1 = arith.constant 0 : index
    %2 = vector.load %arg2[%c0, %c0_0, %c0_1] : memref<1x8x32xf32, #tpu.memory_space<vmem>>, vector<1x8x32xf32>
    %3 = vector.shape_cast %2 : vector<1x8x32xf32> to vector<8x32xf32>
    %c0_2 = arith.constant 0 : index
    %4 = arith.index_cast %1 : i32 to index
    %c0_3 = arith.constant 0 : index
    %5 = vector.load %arg3[%c0_2, %4, %c0_3] : memref<1x32x32xf32, #tpu.memory_space<vmem>>, vector<1x32x32xf32>
    %6 = vector.shape_cast %5 : vector<1x32x32xf32> to vector<32x32xf32>
    %c0_4 = arith.constant 0 : index
    %7 = arith.index_cast %1 : i32 to index
    %c0_5 = arith.constant 0 : index
    %8 = vector.load %arg4[%c0_4, %7, %c0_5] : memref<1x32x32xf32, #tpu.memory_space<vmem>>, vector<1x32x32xf32>
    %9 = vector.shape_cast %8 : vector<1x32x32xf32> to vector<32x32xf32>
    %c0_6 = arith.constant 0 : index
    %c0_7 = arith.constant 0 : index
    %10 = vector.load %arg8[%c0_6, %c0_7] : memref<32x32xf32, #tpu.memory_space<vmem>>, vector<32x32xf32>
    %c0_8 = arith.constant 0 : index
    %c0_9 = arith.constant 0 : index
    %11 = vector.load %arg9[%c0_8, %c0_9] : memref<8x24xf32, #tpu.memory_space<vmem>>, vector<8x24xf32>
    %c0_10 = arith.constant 0 : index
    %c0_11 = arith.constant 0 : index
    %12 = vector.load %arg5[%c0_10, %c0_11] : memref<32x32xf32, #tpu.memory_space<vmem>>, vector<32x32xf32>
    %cst = arith.constant dense<0.000000e+00> : vector<8x32xf32>
    %13 = tpu.matmul %3, %12, %cst {dimension_numbers = #tpu.dot_dimension_numbers<[1], [0], [0], [1], [0, 0, 1, 1], [], []>} : vector<8x32xf32>, vector<32x32xf32>, vector<8x32xf32> -> vector<8x32xf32>
    %cst_12 = arith.constant 0.353553385 : f32
    %14 = vector.broadcast %cst_12 : f32 to vector<8x32xf32>
    %15 = arith.mulf %13, %14 : vector<8x32xf32>
    %c0_13 = arith.constant 0 : index
    %c0_14 = arith.constant 0 : index
    %16 = vector.load %arg6[%c0_13, %c0_14] : memref<32x32xf32, #tpu.memory_space<vmem>>, vector<32x32xf32>
    %cst_15 = arith.constant dense<0.000000e+00> : vector<32x32xf32>
    %17 = tpu.matmul %6, %16, %cst_15 {dimension_numbers = #tpu.dot_dimension_numbers<[1], [0], [0], [1], [0, 0, 1, 1], [], []>} : vector<32x32xf32>, vector<32x32xf32>, vector<32x32xf32> -> vector<32x32xf32>
    %c0_16 = arith.constant 0 : index
    %c0_17 = arith.constant 0 : index
    %18 = vector.load %arg7[%c0_16, %c0_17] : memref<32x32xf32, #tpu.memory_space<vmem>>, vector<32x32xf32>
    %cst_18 = arith.constant dense<0.000000e+00> : vector<32x32xf32>
    %19 = tpu.matmul %9, %18, %cst_18 {dimension_numbers = #tpu.dot_dimension_numbers<[1], [0], [0], [1], [0, 0, 1, 1], [], []>} : vector<32x32xf32>, vector<32x32xf32>, vector<32x32xf32> -> vector<32x32xf32>
    %20 = vector.extract_strided_slice %15 {offsets = [0, 0], sizes = [8, 8], strides = [1, 1]} : vector<8x32xf32> to vector<8x8xf32>
    %21 = vector.extract_strided_slice %17 {offsets = [0, 0], sizes = [32, 8], strides = [1, 1]} : vector<32x32xf32> to vector<32x8xf32>
    %22 = vector.extract_strided_slice %19 {offsets = [0, 0], sizes = [32, 8], strides = [1, 1]} : vector<32x32xf32> to vector<32x8xf32>
    %cst_19 = arith.constant dense<0.000000e+00> : vector<8x32xf32>
    %23 = tpu.matmul %20, %21, %cst_19 {dimension_numbers = #tpu.dot_dimension_numbers<[1], [1], [0], [0], [0, 0, 1, 0], [], []>} : vector<8x8xf32>, vector<32x8xf32>, vector<8x32xf32> -> vector<8x32xf32>
    %24 = tpu.iota {dimensions = array<i32: 0>} : vector<8x1xi32>
    %25 = vector.extract_strided_slice %23 {offsets = [0, 1], sizes = [8, 31], strides = [1, 1]} : vector<8x32xf32> to vector<8x31xf32>
    %26 = vector.extract_strided_slice %23 {offsets = [0, 0], sizes = [8, 1], strides = [1, 1]} : vector<8x32xf32> to vector<8x1xf32>
    %27 = tpu.concatenate %25, %26 in 1 : vector<8x31xf32>, vector<8x1xf32> -> vector<8x32xf32>
    %c1_i32 = arith.constant 1 : i32
    %28 = vector.broadcast %c1_i32 : i32 to vector<8x1xi32>
    %29 = arith.andi %24, %28 : vector<8x1xi32>
    %c0_i32 = arith.constant 0 : i32
    %30 = vector.broadcast %c0_i32 : i32 to vector<8x1xi32>
    %31 = arith.cmpi ne, %29, %30 : vector<8x1xi32>
    %32 = vector.shape_cast %31 : vector<8x1xi1> to vector<8x1xi1>
    %33 = vector.broadcast %32 : vector<8x1xi1> to vector<8x32xi1>
    %34 = arith.select %33, %27, %23 : vector<8x32xi1>, vector<8x32xf32>
    %35 = vector.extract_strided_slice %34 {offsets = [0, 2], sizes = [8, 30], strides = [1, 1]} : vector<8x32xf32> to vector<8x30xf32>
    %36 = vector.extract_strided_slice %34 {offsets = [0, 0], sizes = [8, 2], strides = [1, 1]} : vector<8x32xf32> to vector<8x2xf32>
    %37 = tpu.concatenate %35, %36 in 1 : vector<8x30xf32>, vector<8x2xf32> -> vector<8x32xf32>
    %c2_i32 = arith.constant 2 : i32
    %38 = vector.broadcast %c2_i32 : i32 to vector<8x1xi32>
    %39 = arith.andi %24, %38 : vector<8x1xi32>
    %c0_i32_20 = arith.constant 0 : i32
    %40 = vector.broadcast %c0_i32_20 : i32 to vector<8x1xi32>
    %41 = arith.cmpi ne, %39, %40 : vector<8x1xi32>
    %42 = vector.shape_cast %41 : vector<8x1xi1> to vector<8x1xi1>
    %43 = vector.broadcast %42 : vector<8x1xi1> to vector<8x32xi1>
    %44 = arith.select %43, %37, %34 : vector<8x32xi1>, vector<8x32xf32>
    %45 = vector.extract_strided_slice %44 {offsets = [0, 4], sizes = [8, 28], strides = [1, 1]} : vector<8x32xf32> to vector<8x28xf32>
    %46 = vector.extract_strided_slice %44 {offsets = [0, 0], sizes = [8, 4], strides = [1, 1]} : vector<8x32xf32> to vector<8x4xf32>
    %47 = tpu.concatenate %45, %46 in 1 : vector<8x28xf32>, vector<8x4xf32> -> vector<8x32xf32>
    %c4_i32 = arith.constant 4 : i32
    %48 = vector.broadcast %c4_i32 : i32 to vector<8x1xi32>
    %49 = arith.andi %24, %48 : vector<8x1xi32>
    %c0_i32_21 = arith.constant 0 : i32
    %50 = vector.broadcast %c0_i32_21 : i32 to vector<8x1xi32>
    %51 = arith.cmpi ne, %49, %50 : vector<8x1xi32>
    %52 = vector.shape_cast %51 : vector<8x1xi1> to vector<8x1xi1>
    %53 = vector.broadcast %52 : vector<8x1xi1> to vector<8x32xi1>
    %54 = arith.select %53, %47, %44 : vector<8x32xi1>, vector<8x32xf32>
    %55 = vector.extract_strided_slice %54 {offsets = [0, 0], sizes = [8, 24], strides = [1, 1]} : vector<8x32xf32> to vector<8x24xf32>
    %cst_22 = arith.constant dense<0.000000e+00> : vector<8x24xf32>
    %56 = tpu.matmul %20, %11, %cst_22 {dimension_numbers = #tpu.dot_dimension_numbers<[1], [0], [0], [1], [0, 0, 1, 1], [], []>} : vector<8x8xf32>, vector<8x24xf32>, vector<8x24xf32> -> vector<8x24xf32>
    %57 = arith.addf %55, %56 : vector<8x24xf32>
    %cst_23 = arith.constant dense<0xFF800000> : vector<8xf32>
    %58 = vector.multi_reduction <maximumf>, %57, %cst_23 [1] : vector<8x24xf32> to vector<8xf32>
    %59 = vector.shape_cast %58 : vector<8xf32> to vector<8x1xf32>
    %60 = vector.broadcast %59 : vector<8x1xf32> to vector<8x24xf32>
    %61 = arith.subf %57, %60 : vector<8x24xf32>
    %62 = math.exp %61 : vector<8x24xf32>
    %cst_24 = arith.constant dense<0.000000e+00> : vector<8xf32>
    %63 = vector.multi_reduction <add>, %62, %cst_24 [1] : vector<8x24xf32> to vector<8xf32>
    %64 = vector.shape_cast %63 : vector<8xf32> to vector<8x1xf32>
    %65 = tpu.reciprocal %64 {approx = true} : vector<8x1xf32> -> vector<8x1xf32>
    %66 = vector.broadcast %65 : vector<8x1xf32> to vector<8x24xf32>
    %67 = arith.mulf %62, %66 : vector<8x24xf32>
    %cst_25 = arith.constant 0.000000e+00 : f32
    %68 = vector.broadcast %cst_25 : f32 to vector<8x8xf32>
    %69 = tpu.concatenate %67, %68 in 1 : vector<8x24xf32>, vector<8x8xf32> -> vector<8x32xf32>
    %70 = tpu.iota {dimensions = array<i32: 0>} : vector<8x1xi32>
    %71 = vector.extract_strided_slice %69 {offsets = [0, 31], sizes = [8, 1], strides = [1, 1]} : vector<8x32xf32> to vector<8x1xf32>
    %72 = vector.extract_strided_slice %69 {offsets = [0, 0], sizes = [8, 31], strides = [1, 1]} : vector<8x32xf32> to vector<8x31xf32>
    %73 = tpu.concatenate %71, %72 in 1 : vector<8x1xf32>, vector<8x31xf32> -> vector<8x32xf32>
    %c1_i32_26 = arith.constant 1 : i32
    %74 = vector.broadcast %c1_i32_26 : i32 to vector<8x1xi32>
    %75 = arith.andi %70, %74 : vector<8x1xi32>
    %c0_i32_27 = arith.constant 0 : i32
    %76 = vector.broadcast %c0_i32_27 : i32 to vector<8x1xi32>
    %77 = arith.cmpi ne, %75, %76 : vector<8x1xi32>
    %78 = vector.shape_cast %77 : vector<8x1xi1> to vector<8x1xi1>
    %79 = vector.broadcast %78 : vector<8x1xi1> to vector<8x32xi1>
    %80 = arith.select %79, %73, %69 : vector<8x32xi1>, vector<8x32xf32>
    %81 = vector.extract_strided_slice %80 {offsets = [0, 30], sizes = [8, 2], strides = [1, 1]} : vector<8x32xf32> to vector<8x2xf32>
    %82 = vector.extract_strided_slice %80 {offsets = [0, 0], sizes = [8, 30], strides = [1, 1]} : vector<8x32xf32> to vector<8x30xf32>
    %83 = tpu.concatenate %81, %82 in 1 : vector<8x2xf32>, vector<8x30xf32> -> vector<8x32xf32>
    %c2_i32_28 = arith.constant 2 : i32
    %84 = vector.broadcast %c2_i32_28 : i32 to vector<8x1xi32>
    %85 = arith.andi %70, %84 : vector<8x1xi32>
    %c0_i32_29 = arith.constant 0 : i32
    %86 = vector.broadcast %c0_i32_29 : i32 to vector<8x1xi32>
    %87 = arith.cmpi ne, %85, %86 : vector<8x1xi32>
    %88 = vector.shape_cast %87 : vector<8x1xi1> to vector<8x1xi1>
    %89 = vector.broadcast %88 : vector<8x1xi1> to vector<8x32xi1>
    %90 = arith.select %89, %83, %80 : vector<8x32xi1>, vector<8x32xf32>
    %91 = vector.extract_strided_slice %90 {offsets = [0, 28], sizes = [8, 4], strides = [1, 1]} : vector<8x32xf32> to vector<8x4xf32>
    %92 = vector.extract_strided_slice %90 {offsets = [0, 0], sizes = [8, 28], strides = [1, 1]} : vector<8x32xf32> to vector<8x28xf32>
    %93 = tpu.concatenate %91, %92 in 1 : vector<8x4xf32>, vector<8x28xf32> -> vector<8x32xf32>
    %c4_i32_30 = arith.constant 4 : i32
    %94 = vector.broadcast %c4_i32_30 : i32 to vector<8x1xi32>
    %95 = arith.andi %70, %94 : vector<8x1xi32>
    %c0_i32_31 = arith.constant 0 : i32
    %96 = vector.broadcast %c0_i32_31 : i32 to vector<8x1xi32>
    %97 = arith.cmpi ne, %95, %96 : vector<8x1xi32>
    %98 = vector.shape_cast %97 : vector<8x1xi1> to vector<8x1xi1>
    %99 = vector.broadcast %98 : vector<8x1xi1> to vector<8x32xi1>
    %100 = arith.select %99, %93, %90 : vector<8x32xi1>, vector<8x32xf32>
    %cst_32 = arith.constant dense<0.000000e+00> : vector<8x8xf32>
    %101 = tpu.matmul %100, %22, %cst_32 {dimension_numbers = #tpu.dot_dimension_numbers<[1], [0], [0], [1], [0, 0, 1, 1], [], []>} : vector<8x32xf32>, vector<32x8xf32>, vector<8x8xf32> -> vector<8x8xf32>
    %c0_33 = arith.constant 0 : index
    %c0_34 = arith.constant 0 : index
    %102 = vector.load %arg11[%c0_33, %c0_34] : memref<8x32xf32, #tpu.memory_space<vmem>>, vector<8x8xf32>
    tpu.vector_store %arg11[%c0_33, %c0_34], %101 {strides = array<i32>} : memref<8x32xf32, #tpu.memory_space<vmem>>, vector<8x8xf32>,
    %103 = vector.extract_strided_slice %15 {offsets = [0, 8], sizes = [8, 8], strides = [1, 1]} : vector<8x32xf32> to vector<8x8xf32>
    %104 = vector.extract_strided_slice %17 {offsets = [0, 8], sizes = [32, 8], strides = [1, 1]} : vector<32x32xf32> to vector<32x8xf32>
    %105 = vector.extract_strided_slice %19 {offsets = [0, 8], sizes = [32, 8], strides = [1, 1]} : vector<32x32xf32> to vector<32x8xf32>
    %cst_35 = arith.constant dense<0.000000e+00> : vector<8x32xf32>
    %106 = tpu.matmul %103, %104, %cst_35 {dimension_numbers = #tpu.dot_dimension_numbers<[1], [1], [0], [0], [0, 0, 1, 0], [], []>} : vector<8x8xf32>, vector<32x8xf32>, vector<8x32xf32> -> vector<8x32xf32>
    %107 = tpu.iota {dimensions = array<i32: 0>} : vector<8x1xi32>
    %108 = vector.extract_strided_slice %106 {offsets = [0, 1], sizes = [8, 31], strides = [1, 1]} : vector<8x32xf32> to vector<8x31xf32>
    %109 = vector.extract_strided_slice %106 {offsets = [0, 0], sizes = [8, 1], strides = [1, 1]} : vector<8x32xf32> to vector<8x1xf32>
    %110 = tpu.concatenate %108, %109 in 1 : vector<8x31xf32>, vector<8x1xf32> -> vector<8x32xf32>
    %c1_i32_36 = arith.constant 1 : i32
    %111 = vector.broadcast %c1_i32_36 : i32 to vector<8x1xi32>
    %112 = arith.andi %107, %111 : vector<8x1xi32>
    %c0_i32_37 = arith.constant 0 : i32
    %113 = vector.broadcast %c0_i32_37 : i32 to vector<8x1xi32>
    %114 = arith.cmpi ne, %112, %113 : vector<8x1xi32>
    %115 = vector.shape_cast %114 : vector<8x1xi1> to vector<8x1xi1>
    %116 = vector.broadcast %115 : vector<8x1xi1> to vector<8x32xi1>
    %117 = arith.select %116, %110, %106 : vector<8x32xi1>, vector<8x32xf32>
    %118 = vector.extract_strided_slice %117 {offsets = [0, 2], sizes = [8, 30], strides = [1, 1]} : vector<8x32xf32> to vector<8x30xf32>
    %119 = vector.extract_strided_slice %117 {offsets = [0, 0], sizes = [8, 2], strides = [1, 1]} : vector<8x32xf32> to vector<8x2xf32>
    %120 = tpu.concatenate %118, %119 in 1 : vector<8x30xf32>, vector<8x2xf32> -> vector<8x32xf32>
    %c2_i32_38 = arith.constant 2 : i32
    %121 = vector.broadcast %c2_i32_38 : i32 to vector<8x1xi32>
    %122 = arith.andi %107, %121 : vector<8x1xi32>
    %c0_i32_39 = arith.constant 0 : i32
    %123 = vector.broadcast %c0_i32_39 : i32 to vector<8x1xi32>
    %124 = arith.cmpi ne, %122, %123 : vector<8x1xi32>
    %125 = vector.shape_cast %124 : vector<8x1xi1> to vector<8x1xi1>
    %126 = vector.broadcast %125 : vector<8x1xi1> to vector<8x32xi1>
    %127 = arith.select %126, %120, %117 : vector<8x32xi1>, vector<8x32xf32>
    %128 = vector.extract_strided_slice %127 {offsets = [0, 4], sizes = [8, 28], strides = [1, 1]} : vector<8x32xf32> to vector<8x28xf32>
    %129 = vector.extract_strided_slice %127 {offsets = [0, 0], sizes = [8, 4], strides = [1, 1]} : vector<8x32xf32> to vector<8x4xf32>
    %130 = tpu.concatenate %128, %129 in 1 : vector<8x28xf32>, vector<8x4xf32> -> vector<8x32xf32>
    %c4_i32_40 = arith.constant 4 : i32
    %131 = vector.broadcast %c4_i32_40 : i32 to vector<8x1xi32>
    %132 = arith.andi %107, %131 : vector<8x1xi32>
    %c0_i32_41 = arith.constant 0 : i32
    %133 = vector.broadcast %c0_i32_41 : i32 to vector<8x1xi32>
    %134 = arith.cmpi ne, %132, %133 : vector<8x1xi32>
    %135 = vector.shape_cast %134 : vector<8x1xi1> to vector<8x1xi1>
    %136 = vector.broadcast %135 : vector<8x1xi1> to vector<8x32xi1>
    %137 = arith.select %136, %130, %127 : vector<8x32xi1>, vector<8x32xf32>
    %138 = vector.extract_strided_slice %137 {offsets = [0, 0], sizes = [8, 24], strides = [1, 1]} : vector<8x32xf32> to vector<8x24xf32>
    %cst_42 = arith.constant dense<0.000000e+00> : vector<8x24xf32>
    %139 = tpu.matmul %103, %11, %cst_42 {dimension_numbers = #tpu.dot_dimension_numbers<[1], [0], [0], [1], [0, 0, 1, 1], [], []>} : vector<8x8xf32>, vector<8x24xf32>, vector<8x24xf32> -> vector<8x24xf32>
    %140 = arith.addf %138, %139 : vector<8x24xf32>
    %cst_43 = arith.constant dense<0xFF800000> : vector<8xf32>
    %141 = vector.multi_reduction <maximumf>, %140, %cst_43 [1] : vector<8x24xf32> to vector<8xf32>
    %142 = vector.shape_cast %141 : vector<8xf32> to vector<8x1xf32>
    %143 = vector.broadcast %142 : vector<8x1xf32> to vector<8x24xf32>
    %144 = arith.subf %140, %143 : vector<8x24xf32>
    %145 = math.exp %144 : vector<8x24xf32>
    %cst_44 = arith.constant dense<0.000000e+00> : vector<8xf32>
    %146 = vector.multi_reduction <add>, %145, %cst_44 [1] : vector<8x24xf32> to vector<8xf32>
    %147 = vector.shape_cast %146 : vector<8xf32> to vector<8x1xf32>
    %148 = tpu.reciprocal %147 {approx = true} : vector<8x1xf32> -> vector<8x1xf32>
    %149 = vector.broadcast %148 : vector<8x1xf32> to vector<8x24xf32>
    %150 = arith.mulf %145, %149 : vector<8x24xf32>
    %cst_45 = arith.constant 0.000000e+00 : f32
    %151 = vector.broadcast %cst_45 : f32 to vector<8x8xf32>
    %152 = tpu.concatenate %150, %151 in 1 : vector<8x24xf32>, vector<8x8xf32> -> vector<8x32xf32>
    %153 = tpu.iota {dimensions = array<i32: 0>} : vector<8x1xi32>
    %154 = vector.extract_strided_slice %152 {offsets = [0, 31], sizes = [8, 1], strides = [1, 1]} : vector<8x32xf32> to vector<8x1xf32>
    %155 = vector.extract_strided_slice %152 {offsets = [0, 0], sizes = [8, 31], strides = [1, 1]} : vector<8x32xf32> to vector<8x31xf32>
    %156 = tpu.concatenate %154, %155 in 1 : vector<8x1xf32>, vector<8x31xf32> -> vector<8x32xf32>
    %c1_i32_46 = arith.constant 1 : i32
    %157 = vector.broadcast %c1_i32_46 : i32 to vector<8x1xi32>
    %158 = arith.andi %153, %157 : vector<8x1xi32>
    %c0_i32_47 = arith.constant 0 : i32
    %159 = vector.broadcast %c0_i32_47 : i32 to vector<8x1xi32>
    %160 = arith.cmpi ne, %158, %159 : vector<8x1xi32>
    %161 = vector.shape_cast %160 : vector<8x1xi1> to vector<8x1xi1>
    %162 = vector.broadcast %161 : vector<8x1xi1> to vector<8x32xi1>
    %163 = arith.select %162, %156, %152 : vector<8x32xi1>, vector<8x32xf32>
    %164 = vector.extract_strided_slice %163 {offsets = [0, 30], sizes = [8, 2], strides = [1, 1]} : vector<8x32xf32> to vector<8x2xf32>
    %165 = vector.extract_strided_slice %163 {offsets = [0, 0], sizes = [8, 30], strides = [1, 1]} : vector<8x32xf32> to vector<8x30xf32>
    %166 = tpu.concatenate %164, %165 in 1 : vector<8x2xf32>, vector<8x30xf32> -> vector<8x32xf32>
    %c2_i32_48 = arith.constant 2 : i32
    %167 = vector.broadcast %c2_i32_48 : i32 to vector<8x1xi32>
    %168 = arith.andi %153, %167 : vector<8x1xi32>
    %c0_i32_49 = arith.constant 0 : i32
    %169 = vector.broadcast %c0_i32_49 : i32 to vector<8x1xi32>
    %170 = arith.cmpi ne, %168, %169 : vector<8x1xi32>
    %171 = vector.shape_cast %170 : vector<8x1xi1> to vector<8x1xi1>
    %172 = vector.broadcast %171 : vector<8x1xi1> to vector<8x32xi1>
    %173 = arith.select %172, %166, %163 : vector<8x32xi1>, vector<8x32xf32>
    %174 = vector.extract_strided_slice %173 {offsets = [0, 28], sizes = [8, 4], strides = [1, 1]} : vector<8x32xf32> to vector<8x4xf32>
    %175 = vector.extract_strided_slice %173 {offsets = [0, 0], sizes = [8, 28], strides = [1, 1]} : vector<8x32xf32> to vector<8x28xf32>
    %176 = tpu.concatenate %174, %175 in 1 : vector<8x4xf32>, vector<8x28xf32> -> vector<8x32xf32>
    %c4_i32_50 = arith.constant 4 : i32
    %177 = vector.broadcast %c4_i32_50 : i32 to vector<8x1xi32>
    %178 = arith.andi %153, %177 : vector<8x1xi32>
    %c0_i32_51 = arith.constant 0 : i32
    %179 = vector.broadcast %c0_i32_51 : i32 to vector<8x1xi32>
    %180 = arith.cmpi ne, %178, %179 : vector<8x1xi32>
    %181 = vector.shape_cast %180 : vector<8x1xi1> to vector<8x1xi1>
    %182 = vector.broadcast %181 : vector<8x1xi1> to vector<8x32xi1>
    %183 = arith.select %182, %176, %173 : vector<8x32xi1>, vector<8x32xf32>
    %cst_52 = arith.constant dense<0.000000e+00> : vector<8x8xf32>
    %184 = tpu.matmul %183, %105, %cst_52 {dimension_numbers = #tpu.dot_dimension_numbers<[1], [0], [0], [1], [0, 0, 1, 1], [], []>} : vector<8x32xf32>, vector<32x8xf32>, vector<8x8xf32> -> vector<8x8xf32>
    %c0_53 = arith.constant 0 : index
    %c8 = arith.constant 8 : index
    %185 = vector.load %arg11[%c0_53, %c8] : memref<8x32xf32, #tpu.memory_space<vmem>>, vector<8x8xf32>
    tpu.vector_store %arg11[%c0_53, %c8], %184 {strides = array<i32>} : memref<8x32xf32, #tpu.memory_space<vmem>>, vector<8x8xf32>,
    %186 = vector.extract_strided_slice %15 {offsets = [0, 16], sizes = [8, 8], strides = [1, 1]} : vector<8x32xf32> to vector<8x8xf32>
    %187 = vector.extract_strided_slice %17 {offsets = [0, 16], sizes = [32, 8], strides = [1, 1]} : vector<32x32xf32> to vector<32x8xf32>
    %188 = vector.extract_strided_slice %19 {offsets = [0, 16], sizes = [32, 8], strides = [1, 1]} : vector<32x32xf32> to vector<32x8xf32>
    %cst_54 = arith.constant dense<0.000000e+00> : vector<8x32xf32>
    %189 = tpu.matmul %186, %187, %cst_54 {dimension_numbers = #tpu.dot_dimension_numbers<[1], [1], [0], [0], [0, 0, 1, 0], [], []>} : vector<8x8xf32>, vector<32x8xf32>, vector<8x32xf32> -> vector<8x32xf32>
    %190 = tpu.iota {dimensions = array<i32: 0>} : vector<8x1xi32>
    %191 = vector.extract_strided_slice %189 {offsets = [0, 1], sizes = [8, 31], strides = [1, 1]} : vector<8x32xf32> to vector<8x31xf32>
    %192 = vector.extract_strided_slice %189 {offsets = [0, 0], sizes = [8, 1], strides = [1, 1]} : vector<8x32xf32> to vector<8x1xf32>
    %193 = tpu.concatenate %191, %192 in 1 : vector<8x31xf32>, vector<8x1xf32> -> vector<8x32xf32>
    %c1_i32_55 = arith.constant 1 : i32
    %194 = vector.broadcast %c1_i32_55 : i32 to vector<8x1xi32>
    %195 = arith.andi %190, %194 : vector<8x1xi32>
    %c0_i32_56 = arith.constant 0 : i32
    %196 = vector.broadcast %c0_i32_56 : i32 to vector<8x1xi32>
    %197 = arith.cmpi ne, %195, %196 : vector<8x1xi32>
    %198 = vector.shape_cast %197 : vector<8x1xi1> to vector<8x1xi1>
    %199 = vector.broadcast %198 : vector<8x1xi1> to vector<8x32xi1>
    %200 = arith.select %199, %193, %189 : vector<8x32xi1>, vector<8x32xf32>
    %201 = vector.extract_strided_slice %200 {offsets = [0, 2], sizes = [8, 30], strides = [1, 1]} : vector<8x32xf32> to vector<8x30xf32>
    %202 = vector.extract_strided_slice %200 {offsets = [0, 0], sizes = [8, 2], strides = [1, 1]} : vector<8x32xf32> to vector<8x2xf32>
    %203 = tpu.concatenate %201, %202 in 1 : vector<8x30xf32>, vector<8x2xf32> -> vector<8x32xf32>
    %c2_i32_57 = arith.constant 2 : i32
    %204 = vector.broadcast %c2_i32_57 : i32 to vector<8x1xi32>
    %205 = arith.andi %190, %204 : vector<8x1xi32>
    %c0_i32_58 = arith.constant 0 : i32
    %206 = vector.broadcast %c0_i32_58 : i32 to vector<8x1xi32>
    %207 = arith.cmpi ne, %205, %206 : vector<8x1xi32>
    %208 = vector.shape_cast %207 : vector<8x1xi1> to vector<8x1xi1>
    %209 = vector.broadcast %208 : vector<8x1xi1> to vector<8x32xi1>
    %210 = arith.select %209, %203, %200 : vector<8x32xi1>, vector<8x32xf32>
    %211 = vector.extract_strided_slice %210 {offsets = [0, 4], sizes = [8, 28], strides = [1, 1]} : vector<8x32xf32> to vector<8x28xf32>
    %212 = vector.extract_strided_slice %210 {offsets = [0, 0], sizes = [8, 4], strides = [1, 1]} : vector<8x32xf32> to vector<8x4xf32>
    %213 = tpu.concatenate %211, %212 in 1 : vector<8x28xf32>, vector<8x4xf32> -> vector<8x32xf32>
    %c4_i32_59 = arith.constant 4 : i32
    %214 = vector.broadcast %c4_i32_59 : i32 to vector<8x1xi32>
    %215 = arith.andi %190, %214 : vector<8x1xi32>
    %c0_i32_60 = arith.constant 0 : i32
    %216 = vector.broadcast %c0_i32_60 : i32 to vector<8x1xi32>
    %217 = arith.cmpi ne, %215, %216 : vector<8x1xi32>
    %218 = vector.shape_cast %217 : vector<8x1xi1> to vector<8x1xi1>
    %219 = vector.broadcast %218 : vector<8x1xi1> to vector<8x32xi1>
    %220 = arith.select %219, %213, %210 : vector<8x32xi1>, vector<8x32xf32>
    %221 = vector.extract_strided_slice %220 {offsets = [0, 0], sizes = [8, 24], strides = [1, 1]} : vector<8x32xf32> to vector<8x24xf32>
    %cst_61 = arith.constant dense<0.000000e+00> : vector<8x24xf32>
    %222 = tpu.matmul %186, %11, %cst_61 {dimension_numbers = #tpu.dot_dimension_numbers<[1], [0], [0], [1], [0, 0, 1, 1], [], []>} : vector<8x8xf32>, vector<8x24xf32>, vector<8x24xf32> -> vector<8x24xf32>
    %223 = arith.addf %221, %222 : vector<8x24xf32>
    %cst_62 = arith.constant dense<0xFF800000> : vector<8xf32>
    %224 = vector.multi_reduction <maximumf>, %223, %cst_62 [1] : vector<8x24xf32> to vector<8xf32>
    %225 = vector.shape_cast %224 : vector<8xf32> to vector<8x1xf32>
    %226 = vector.broadcast %225 : vector<8x1xf32> to vector<8x24xf32>
    %227 = arith.subf %223, %226 : vector<8x24xf32>
    %228 = math.exp %227 : vector<8x24xf32>
    %cst_63 = arith.constant dense<0.000000e+00> : vector<8xf32>
    %229 = vector.multi_reduction <add>, %228, %cst_63 [1] : vector<8x24xf32> to vector<8xf32>
    %230 = vector.shape_cast %229 : vector<8xf32> to vector<8x1xf32>
    %231 = tpu.reciprocal %230 {approx = true} : vector<8x1xf32> -> vector<8x1xf32>
    %232 = vector.broadcast %231 : vector<8x1xf32> to vector<8x24xf32>
    %233 = arith.mulf %228, %232 : vector<8x24xf32>
    %cst_64 = arith.constant 0.000000e+00 : f32
    %234 = vector.broadcast %cst_64 : f32 to vector<8x8xf32>
    %235 = tpu.concatenate %233, %234 in 1 : vector<8x24xf32>, vector<8x8xf32> -> vector<8x32xf32>
    %236 = tpu.iota {dimensions = array<i32: 0>} : vector<8x1xi32>
    %237 = vector.extract_strided_slice %235 {offsets = [0, 31], sizes = [8, 1], strides = [1, 1]} : vector<8x32xf32> to vector<8x1xf32>
    %238 = vector.extract_strided_slice %235 {offsets = [0, 0], sizes = [8, 31], strides = [1, 1]} : vector<8x32xf32> to vector<8x31xf32>
    %239 = tpu.concatenate %237, %238 in 1 : vector<8x1xf32>, vector<8x31xf32> -> vector<8x32xf32>
    %c1_i32_65 = arith.constant 1 : i32
    %240 = vector.broadcast %c1_i32_65 : i32 to vector<8x1xi32>
    %241 = arith.andi %236, %240 : vector<8x1xi32>
    %c0_i32_66 = arith.constant 0 : i32
    %242 = vector.broadcast %c0_i32_66 : i32 to vector<8x1xi32>
    %243 = arith.cmpi ne, %241, %242 : vector<8x1xi32>
    %244 = vector.shape_cast %243 : vector<8x1xi1> to vector<8x1xi1>
    %245 = vector.broadcast %244 : vector<8x1xi1> to vector<8x32xi1>
    %246 = arith.select %245, %239, %235 : vector<8x32xi1>, vector<8x32xf32>
    %247 = vector.extract_strided_slice %246 {offsets = [0, 30], sizes = [8, 2], strides = [1, 1]} : vector<8x32xf32> to vector<8x2xf32>
    %248 = vector.extract_strided_slice %246 {offsets = [0, 0], sizes = [8, 30], strides = [1, 1]} : vector<8x32xf32> to vector<8x30xf32>
    %249 = tpu.concatenate %247, %248 in 1 : vector<8x2xf32>, vector<8x30xf32> -> vector<8x32xf32>
    %c2_i32_67 = arith.constant 2 : i32
    %250 = vector.broadcast %c2_i32_67 : i32 to vector<8x1xi32>
    %251 = arith.andi %236, %250 : vector<8x1xi32>
    %c0_i32_68 = arith.constant 0 : i32
    %252 = vector.broadcast %c0_i32_68 : i32 to vector<8x1xi32>
    %253 = arith.cmpi ne, %251, %252 : vector<8x1xi32>
    %254 = vector.shape_cast %253 : vector<8x1xi1> to vector<8x1xi1>
    %255 = vector.broadcast %254 : vector<8x1xi1> to vector<8x32xi1>
    %256 = arith.select %255, %249, %246 : vector<8x32xi1>, vector<8x32xf32>
    %257 = vector.extract_strided_slice %256 {offsets = [0, 28], sizes = [8, 4], strides = [1, 1]} : vector<8x32xf32> to vector<8x4xf32>
    %258 = vector.extract_strided_slice %256 {offsets = [0, 0], sizes = [8, 28], strides = [1, 1]} : vector<8x32xf32> to vector<8x28xf32>
    %259 = tpu.concatenate %257, %258 in 1 : vector<8x4xf32>, vector<8x28xf32> -> vector<8x32xf32>
    %c4_i32_69 = arith.constant 4 : i32
    %260 = vector.broadcast %c4_i32_69 : i32 to vector<8x1xi32>
    %261 = arith.andi %236, %260 : vector<8x1xi32>
    %c0_i32_70 = arith.constant 0 : i32
    %262 = vector.broadcast %c0_i32_70 : i32 to vector<8x1xi32>
    %263 = arith.cmpi ne, %261, %262 : vector<8x1xi32>
    %264 = vector.shape_cast %263 : vector<8x1xi1> to vector<8x1xi1>
    %265 = vector.broadcast %264 : vector<8x1xi1> to vector<8x32xi1>
    %266 = arith.select %265, %259, %256 : vector<8x32xi1>, vector<8x32xf32>
    %cst_71 = arith.constant dense<0.000000e+00> : vector<8x8xf32>
    %267 = tpu.matmul %266, %188, %cst_71 {dimension_numbers = #tpu.dot_dimension_numbers<[1], [0], [0], [1], [0, 0, 1, 1], [], []>} : vector<8x32xf32>, vector<32x8xf32>, vector<8x8xf32> -> vector<8x8xf32>
    %c0_72 = arith.constant 0 : index
    %c16 = arith.constant 16 : index
    %268 = vector.load %arg11[%c0_72, %c16] : memref<8x32xf32, #tpu.memory_space<vmem>>, vector<8x8xf32>
    tpu.vector_store %arg11[%c0_72, %c16], %267 {strides = array<i32>} : memref<8x32xf32, #tpu.memory_space<vmem>>, vector<8x8xf32>,
    %269 = vector.extract_strided_slice %15 {offsets = [0, 24], sizes = [8, 8], strides = [1, 1]} : vector<8x32xf32> to vector<8x8xf32>
    %270 = vector.extract_strided_slice %17 {offsets = [0, 24], sizes = [32, 8], strides = [1, 1]} : vector<32x32xf32> to vector<32x8xf32>
    %271 = vector.extract_strided_slice %19 {offsets = [0, 24], sizes = [32, 8], strides = [1, 1]} : vector<32x32xf32> to vector<32x8xf32>
    %cst_73 = arith.constant dense<0.000000e+00> : vector<8x32xf32>
    %272 = tpu.matmul %269, %270, %cst_73 {dimension_numbers = #tpu.dot_dimension_numbers<[1], [1], [0], [0], [0, 0, 1, 0], [], []>} : vector<8x8xf32>, vector<32x8xf32>, vector<8x32xf32> -> vector<8x32xf32>
    %273 = tpu.iota {dimensions = array<i32: 0>} : vector<8x1xi32>
    %274 = vector.extract_strided_slice %272 {offsets = [0, 1], sizes = [8, 31], strides = [1, 1]} : vector<8x32xf32> to vector<8x31xf32>
    %275 = vector.extract_strided_slice %272 {offsets = [0, 0], sizes = [8, 1], strides = [1, 1]} : vector<8x32xf32> to vector<8x1xf32>
    %276 = tpu.concatenate %274, %275 in 1 : vector<8x31xf32>, vector<8x1xf32> -> vector<8x32xf32>
    %c1_i32_74 = arith.constant 1 : i32
    %277 = vector.broadcast %c1_i32_74 : i32 to vector<8x1xi32>
    %278 = arith.andi %273, %277 : vector<8x1xi32>
    %c0_i32_75 = arith.constant 0 : i32
    %279 = vector.broadcast %c0_i32_75 : i32 to vector<8x1xi32>
    %280 = arith.cmpi ne, %278, %279 : vector<8x1xi32>
    %281 = vector.shape_cast %280 : vector<8x1xi1> to vector<8x1xi1>
    %282 = vector.broadcast %281 : vector<8x1xi1> to vector<8x32xi1>
    %283 = arith.select %282, %276, %272 : vector<8x32xi1>, vector<8x32xf32>
    %284 = vector.extract_strided_slice %283 {offsets = [0, 2], sizes = [8, 30], strides = [1, 1]} : vector<8x32xf32> to vector<8x30xf32>
    %285 = vector.extract_strided_slice %283 {offsets = [0, 0], sizes = [8, 2], strides = [1, 1]} : vector<8x32xf32> to vector<8x2xf32>
    %286 = tpu.concatenate %284, %285 in 1 : vector<8x30xf32>, vector<8x2xf32> -> vector<8x32xf32>
    %c2_i32_76 = arith.constant 2 : i32
    %287 = vector.broadcast %c2_i32_76 : i32 to vector<8x1xi32>
    %288 = arith.andi %273, %287 : vector<8x1xi32>
    %c0_i32_77 = arith.constant 0 : i32
    %289 = vector.broadcast %c0_i32_77 : i32 to vector<8x1xi32>
    %290 = arith.cmpi ne, %288, %289 : vector<8x1xi32>
    %291 = vector.shape_cast %290 : vector<8x1xi1> to vector<8x1xi1>
    %292 = vector.broadcast %291 : vector<8x1xi1> to vector<8x32xi1>
    %293 = arith.select %292, %286, %283 : vector<8x32xi1>, vector<8x32xf32>
    %294 = vector.extract_strided_slice %293 {offsets = [0, 4], sizes = [8, 28], strides = [1, 1]} : vector<8x32xf32> to vector<8x28xf32>
    %295 = vector.extract_strided_slice %293 {offsets = [0, 0], sizes = [8, 4], strides = [1, 1]} : vector<8x32xf32> to vector<8x4xf32>
    %296 = tpu.concatenate %294, %295 in 1 : vector<8x28xf32>, vector<8x4xf32> -> vector<8x32xf32>
    %c4_i32_78 = arith.constant 4 : i32
    %297 = vector.broadcast %c4_i32_78 : i32 to vector<8x1xi32>
    %298 = arith.andi %273, %297 : vector<8x1xi32>
    %c0_i32_79 = arith.constant 0 : i32
    %299 = vector.broadcast %c0_i32_79 : i32 to vector<8x1xi32>
    %300 = arith.cmpi ne, %298, %299 : vector<8x1xi32>
    %301 = vector.shape_cast %300 : vector<8x1xi1> to vector<8x1xi1>
    %302 = vector.broadcast %301 : vector<8x1xi1> to vector<8x32xi1>
    %303 = arith.select %302, %296, %293 : vector<8x32xi1>, vector<8x32xf32>
    %304 = vector.extract_strided_slice %303 {offsets = [0, 0], sizes = [8, 24], strides = [1, 1]} : vector<8x32xf32> to vector<8x24xf32>
    %cst_80 = arith.constant dense<0.000000e+00> : vector<8x24xf32>
    %305 = tpu.matmul %269, %11, %cst_80 {dimension_numbers = #tpu.dot_dimension_numbers<[1], [0], [0], [1], [0, 0, 1, 1], [], []>} : vector<8x8xf32>, vector<8x24xf32>, vector<8x24xf32> -> vector<8x24xf32>
    %306 = arith.addf %304, %305 : vector<8x24xf32>
    %cst_81 = arith.constant dense<0xFF800000> : vector<8xf32>
    %307 = vector.multi_reduction <maximumf>, %306, %cst_81 [1] : vector<8x24xf32> to vector<8xf32>
    %308 = vector.shape_cast %307 : vector<8xf32> to vector<8x1xf32>
    %309 = vector.broadcast %308 : vector<8x1xf32> to vector<8x24xf32>
    %310 = arith.subf %306, %309 : vector<8x24xf32>
    %311 = math.exp %310 : vector<8x24xf32>
    %cst_82 = arith.constant dense<0.000000e+00> : vector<8xf32>
    %312 = vector.multi_reduction <add>, %311, %cst_82 [1] : vector<8x24xf32> to vector<8xf32>
    %313 = vector.shape_cast %312 : vector<8xf32> to vector<8x1xf32>
    %314 = tpu.reciprocal %313 {approx = true} : vector<8x1xf32> -> vector<8x1xf32>
    %315 = vector.broadcast %314 : vector<8x1xf32> to vector<8x24xf32>
    %316 = arith.mulf %311, %315 : vector<8x24xf32>
    %cst_83 = arith.constant 0.000000e+00 : f32
    %317 = vector.broadcast %cst_83 : f32 to vector<8x8xf32>
    %318 = tpu.concatenate %316, %317 in 1 : vector<8x24xf32>, vector<8x8xf32> -> vector<8x32xf32>
    %319 = tpu.iota {dimensions = array<i32: 0>} : vector<8x1xi32>
    %320 = vector.extract_strided_slice %318 {offsets = [0, 31], sizes = [8, 1], strides = [1, 1]} : vector<8x32xf32> to vector<8x1xf32>
    %321 = vector.extract_strided_slice %318 {offsets = [0, 0], sizes = [8, 31], strides = [1, 1]} : vector<8x32xf32> to vector<8x31xf32>
    %322 = tpu.concatenate %320, %321 in 1 : vector<8x1xf32>, vector<8x31xf32> -> vector<8x32xf32>
    %c1_i32_84 = arith.constant 1 : i32
    %323 = vector.broadcast %c1_i32_84 : i32 to vector<8x1xi32>
    %324 = arith.andi %319, %323 : vector<8x1xi32>
    %c0_i32_85 = arith.constant 0 : i32
    %325 = vector.broadcast %c0_i32_85 : i32 to vector<8x1xi32>
    %326 = arith.cmpi ne, %324, %325 : vector<8x1xi32>
    %327 = vector.shape_cast %326 : vector<8x1xi1> to vector<8x1xi1>
    %328 = vector.broadcast %327 : vector<8x1xi1> to vector<8x32xi1>
    %329 = arith.select %328, %322, %318 : vector<8x32xi1>, vector<8x32xf32>
    %330 = vector.extract_strided_slice %329 {offsets = [0, 30], sizes = [8, 2], strides = [1, 1]} : vector<8x32xf32> to vector<8x2xf32>
    %331 = vector.extract_strided_slice %329 {offsets = [0, 0], sizes = [8, 30], strides = [1, 1]} : vector<8x32xf32> to vector<8x30xf32>
    %332 = tpu.concatenate %330, %331 in 1 : vector<8x2xf32>, vector<8x30xf32> -> vector<8x32xf32>
    %c2_i32_86 = arith.constant 2 : i32
    %333 = vector.broadcast %c2_i32_86 : i32 to vector<8x1xi32>
    %334 = arith.andi %319, %333 : vector<8x1xi32>
    %c0_i32_87 = arith.constant 0 : i32
    %335 = vector.broadcast %c0_i32_87 : i32 to vector<8x1xi32>
    %336 = arith.cmpi ne, %334, %335 : vector<8x1xi32>
    %337 = vector.shape_cast %336 : vector<8x1xi1> to vector<8x1xi1>
    %338 = vector.broadcast %337 : vector<8x1xi1> to vector<8x32xi1>
    %339 = arith.select %338, %332, %329 : vector<8x32xi1>, vector<8x32xf32>
    %340 = vector.extract_strided_slice %339 {offsets = [0, 28], sizes = [8, 4], strides = [1, 1]} : vector<8x32xf32> to vector<8x4xf32>
    %341 = vector.extract_strided_slice %339 {offsets = [0, 0], sizes = [8, 28], strides = [1, 1]} : vector<8x32xf32> to vector<8x28xf32>
    %342 = tpu.concatenate %340, %341 in 1 : vector<8x4xf32>, vector<8x28xf32> -> vector<8x32xf32>
    %c4_i32_88 = arith.constant 4 : i32
    %343 = vector.broadcast %c4_i32_88 : i32 to vector<8x1xi32>
    %344 = arith.andi %319, %343 : vector<8x1xi32>
    %c0_i32_89 = arith.constant 0 : i32
    %345 = vector.broadcast %c0_i32_89 : i32 to vector<8x1xi32>
    %346 = arith.cmpi ne, %344, %345 : vector<8x1xi32>
    %347 = vector.shape_cast %346 : vector<8x1xi1> to vector<8x1xi1>
    %348 = vector.broadcast %347 : vector<8x1xi1> to vector<8x32xi1>
    %349 = arith.select %348, %342, %339 : vector<8x32xi1>, vector<8x32xf32>
    %cst_90 = arith.constant dense<0.000000e+00> : vector<8x8xf32>
    %350 = tpu.matmul %349, %271, %cst_90 {dimension_numbers = #tpu.dot_dimension_numbers<[1], [0], [0], [1], [0, 0, 1, 1], [], []>} : vector<8x32xf32>, vector<32x8xf32>, vector<8x8xf32> -> vector<8x8xf32>
    %c0_91 = arith.constant 0 : index
    %c24 = arith.constant 24 : index
    %351 = vector.load %arg11[%c0_91, %c24] : memref<8x32xf32, #tpu.memory_space<vmem>>, vector<8x8xf32>
    tpu.vector_store %arg11[%c0_91, %c24], %350 {strides = array<i32>} : memref<8x32xf32, #tpu.memory_space<vmem>>, vector<8x8xf32>,
    %c0_92 = arith.constant 0 : index
    %c0_93 = arith.constant 0 : index
    %352 = vector.load %arg11[%c0_92, %c0_93] : memref<8x32xf32, #tpu.memory_space<vmem>>, vector<8x32xf32>
    %cst_94 = arith.constant dense<0.000000e+00> : vector<8x32xf32>
    %353 = tpu.matmul %352, %10, %cst_94 {dimension_numbers = #tpu.dot_dimension_numbers<[1], [0], [0], [1], [0, 0, 1, 1], [], []>} : vector<8x32xf32>, vector<32x32xf32>, vector<8x32xf32> -> vector<8x32xf32>
    %c0_95 = arith.constant 0 : index
    %c0_96 = arith.constant 0 : index
    %c0_97 = arith.constant 0 : index
    %354 = vector.load %arg10[%c0_95, %c0_96, %c0_97] : memref<1x8x32xf32, #tpu.memory_space<vmem>>, vector<1x8x32xf32>
    %355 = vector.shape_cast %354 : vector<1x8x32xf32> to vector<8x32xf32>
    %356 = vector.shape_cast %353 : vector<8x32xf32> to vector<1x8x32xf32>
    tpu.vector_store %arg10[%c0_95, %c0_96, %c0_97], %356 {strides = array<i32>} : memref<1x8x32xf32, #tpu.memory_space<vmem>>, vector<1x8x32xf32>,
    return
  }
  func.func @transform_0(%arg0: i32, %arg1: i32) -> (i32, i32, i32) {
    %c0_i32 = arith.constant 0 : i32
    %c0_i32_0 = arith.constant 0 : i32
    return %arg0, %arg1, %c0_i32 : i32, i32, i32
  }
  func.func @transform_1(%arg0: i32, %arg1: i32) -> (i32, i32, i32) {
    %c0_i32 = arith.constant 0 : i32
    %c0_i32_0 = arith.constant 0 : i32
    %c0_i32_1 = arith.constant 0 : i32
    return %arg0, %c0_i32, %c0_i32_0 : i32, i32, i32
  }
  func.func @transform_2(%arg0: i32, %arg1: i32) -> (i32, i32, i32) {
    %c0_i32 = arith.constant 0 : i32
    %c0_i32_0 = arith.constant 0 : i32
    %c0_i32_1 = arith.constant 0 : i32
    return %arg0, %c0_i32, %c0_i32_0 : i32, i32, i32
  }
  func.func @transform_3(%arg0: i32, %arg1: i32) -> (i32, i32) {
    %c0_i32 = arith.constant 0 : i32
    %c0_i32_0 = arith.constant 0 : i32
    %c0_i32_1 = arith.constant 0 : i32
    return %c0_i32, %c0_i32_0 : i32, i32
  }
  func.func @transform_4(%arg0: i32, %arg1: i32) -> (i32, i32) {
    %c0_i32 = arith.constant 0 : i32
    %c0_i32_0 = arith.constant 0 : i32
    %c0_i32_1 = arith.constant 0 : i32
    return %c0_i32, %c0_i32_0 : i32, i32
  }
  func.func @transform_5(%arg0: i32, %arg1: i32) -> (i32, i32) {
    %c0_i32 = arith.constant 0 : i32
    %c0_i32_0 = arith.constant 0 : i32
    %c0_i32_1 = arith.constant 0 : i32
    return %c0_i32, %c0_i32_0 : i32, i32
  }
  func.func @transform_6(%arg0: i32, %arg1: i32) -> (i32, i32) {
    %c0_i32 = arith.constant 0 : i32
    %c0_i32_0 = arith.constant 0 : i32
    %c0_i32_1 = arith.constant 0 : i32
    return %c0_i32, %c0_i32_0 : i32, i32
  }
  func.func @transform_7(%arg0: i32, %arg1: i32) -> (i32, i32) {
    %c0_i32 = arith.constant 0 : i32
    %c0_i32_0 = arith.constant 0 : i32
    %c0_i32_1 = arith.constant 0 : i32
    return %c0_i32, %c0_i32_0 : i32, i32
  }
  func.func @transform_8(%arg0: i32, %arg1: i32) -> (i32, i32, i32) {
    %c0_i32 = arith.constant 0 : i32
    %c0_i32_0 = arith.constant 0 : i32
    return %arg0, %arg1, %c0_i32 : i32, i32, i32
  }
}

</mosaic_0001>

<llo_original>
// kernel: multi_head_seq_attention.1
$region0: #{multi_head_seq_attention.1}
  #allocation0 [shape = 'u32[]', space=smem, size = 0x4, offset = 0x4, fixed_abs, tag = 'smem constant byte address 0x4 - core index']
  #allocation1 [shape = 'u32[144,128]{1,0:T(1,128)}', space=vmem, size = 0x12000, scoped, tag = 'internal scratch']
  #allocation2 [shape = 'f32[8,32]{1,0:T(8,128)}', space=vmem, size = 0x1000, scoped, tag = 'scratch operand']
  %s0 = inlined_call_operand.vmem [shape: f32[2,8,32], index: 0, kind: input, shape index: {}]
  %s1 = inlined_call_operand.hbm [shape: f32[2,32,32], index: 1, kind: input, shape index: {}]
  %s2 = inlined_call_operand.hbm [shape: f32[2,32,32], index: 2, kind: input, shape index: {}]
  %s3 = inlined_call_operand.hbm [shape: f32[32,32], index: 3, kind: input, shape index: {}]
  %s4 = inlined_call_operand.hbm [shape: f32[32,32], index: 4, kind: input, shape index: {}]
  %s5 = inlined_call_operand.hbm [shape: f32[32,32], index: 5, kind: input, shape index: {}]
  %s6 = inlined_call_operand.hbm [shape: f32[32,32], index: 6, kind: input, shape index: {}]
  %s7 = inlined_call_operand.hbm [shape: f32[8,24], index: 7, kind: input, shape index: {}]
  %s8 = inlined_call_operand.hbm [shape: f32[2,8,32], index: 8, kind: output, shape index: {}]
  %s9 = sld [smem:[#allocation0]]
  $region93: #{multi_head_seq_attention.1} parent=0
    _
  %s11 = ssub.s32 1, %s9
  %s12 = scalar_select 0, %s11, %s9
  $region1: #{multi_head_seq_attention.1} parent=0
    #allocation3 [shape = 'u8[32768]{0}', space=vmem, size = 0x8000, scoped, tag = 'input window, operand 1']
    #allocation4 [shape = 's32[2]{0}', space=sflag, size = 0x8, scoped, tag = 'scoped memory for multi_head_seq_attention.1']
    #allocation5 [shape = 's32[2]{0}', space=sflag, size = 0x8, scoped, tag = 'scoped memory for multi_head_seq_attention.1']
    #allocation6 [shape = 'u8[32768]{0}', space=vmem, size = 0x8000, scoped, tag = 'input window, operand 2']
    #allocation7 [shape = 's32[2]{0}', space=sflag, size = 0x8, scoped, tag = 'scoped memory for multi_head_seq_attention.1']
    #allocation8 [shape = 'u8[16384]{0}', space=vmem, size = 0x4000, scoped, tag = 'input window, operand 3, single buffered']
    #allocation9 [shape = 'u8[16384]{0}', space=vmem, size = 0x4000, scoped, tag = 'input window, operand 4, single buffered']
    #allocation10 [shape = 's32[1]{0}', space=sflag, size = 0x4, scoped, tag = 'scoped memory for multi_head_seq_attention.1']
    #allocation11 [shape = 'u8[16384]{0}', space=vmem, size = 0x4000, scoped, tag = 'input window, operand 5, single buffered']
    #allocation12 [shape = 'u8[16384]{0}', space=vmem, size = 0x4000, scoped, tag = 'input window, operand 6, single buffered']
    #allocation13 [shape = 's32[1]{0}', space=sflag, size = 0x4, scoped, tag = 'scoped memory for multi_head_seq_attention.1']
    #allocation14 [shape = 'u8[4096]{0}', space=vmem, size = 0x1000, scoped, tag = 'input window, operand 7, single buffered']
    #allocation15 [shape = 'u8[8192]{0}', space=vmem, size = 0x2000, scoped, tag = 'output window, operand 0']
    %13 = vsyncpa [#allocation4], 0
    %s14 = scalar_lea.sflag [#allocation4], 1
    %15 = vsyncpa %s14, 0
    %16 = vsyncpa [#allocation7], 0
    %s17 = scalar_lea.sflag [#allocation7], 1
    %18 = vsyncpa %s17, 0
    %19 = vsyncpa [#allocation10], 0
    %20 = vsyncpa [#allocation13], 0
    %21 = vsyncpa [#allocation5], 0
    %s22 = scalar_lea.sflag [#allocation5], 1
    %23 = vsyncpa %s22, 0
    loop: start=0, step=1, limit=4
    $region2: #{multi_head_seq_attention.1} parent=1 // loop_pre_header
      _
    $region3: #{multi_head_seq_attention.1} parent=1 // loop_header
      %s25 = sphi 0, %s29
      %p26 = scmp.ge.s32.totalorder %s25, 4
      %s32 = sphi 0, %s44
      %s33 = sphi 0, %s40
      %s34 = sphi 0, %s32
      %s35 = sphi 0, %s33
      %s36 = sphi 0, %s34
      %s37 = sphi 0, %s35
      %s49 = sphi 0, %s51
      %s52 = sphi 0, %s49
      %s53 = sphi 0, %s52
      %s69 = sphi 0, %s53
      %s75 = sphi 0, %s77
      %s78 = sphi 0, %s75
      %s79 = sphi 0, %s78
      %s95 = sphi 0, %s79
      %s101 = sphi 0, %s103
      %s104 = sphi 0, %s101
      %s105 = sphi 0, %s104
      %s121 = sphi 0, %s105
      %s125 = sphi 0, %s125
      %s127 = sphi 0, %s125
      %s128 = sphi 0, %s127
      %s142 = sphi 0, %s128
      %s146 = sphi 0, %s146
      %s148 = sphi 0, %s146
      %s149 = sphi 0, %s148
      %s163 = sphi 0, %s149
      %s167 = sphi 0, %s167
      %s169 = sphi 0, %s167
      %s170 = sphi 0, %s169
      %s184 = sphi 0, %s170
      %s188 = sphi 0, %s188
      %s190 = sphi 0, %s188
      %s191 = sphi 0, %s190
      %s205 = sphi 0, %s191
      %s209 = sphi 0, %s209
      %s211 = sphi 0, %s209
      %s212 = sphi 0, %s211
      %s226 = sphi 0, %s212
      %s234 = sphi 0, %s236
      %s237 = sphi 0, %s234
      %s238 = sphi 0, %s237
      %s254 = sphi 0, %s238
    $region4: #{multi_head_seq_attention.1} parent=1 // loop_header_branch
      %28 = sbr.rel (%p26) target = $region8
    $region5: #{multi_head_seq_attention.1} parent=1 // loop_body
      %s30 = ssub.s32 %s25, 1
      %s31 = ssub.s32 %s25, 2
      %s38 = sadd.s32 1, %s33
      %p39 = scmp.ge.s32.totalorder %s38, 1
      %s40 = scalar_select %p39, 0, %s38
      %s41 = sadd.s32 1, %s32
      %s42 = scalar_select %p39, %s41, %s32
      %p43 = scmp.ge.s32.totalorder %s42, 2
      %s44 = scalar_select %p43, 0, %s42
      %s45 = ssub.s32 %s32, %s44
      %s46 = ssub.s32 %s33, %s40
      %s47 = sor.u32 %s45, %s46
      %p48 = scmp.eq.s32.totalorder %s47, 0
      %s50 = sadd.s32 %s49, 1
      %s51 = scalar_select %p48, %s49, %s50
      %p54 = pneg %p48
      %p55 = scmp.eq.s32.totalorder %s25, 1
      %p56 = por %p54, %p55
      %p57 = scmp.ne.s32.totalorder %s49, %s52
      %p58 = scmp.eq.s32.totalorder %s25, 0
      %p59 = por %p57, %p58
      %p60 = scmp.ne.s32.totalorder %s49, %s52
      %p61 = scmp.eq.s32.totalorder %s30, 1
      %p62 = por %p60, %p61
      %p63 = scmp.ne.s32.totalorder %s52, %s53
      %p64 = scmp.eq.s32.totalorder %s30, 0
      %p65 = por %p63, %p64
      %p66 = scmp.ne.s32.totalorder %s52, %s53
      %p67 = scmp.eq.s32.totalorder %s31, 1
      %p68 = por %p66, %p67
      %p70 = scmp.ne.s32.totalorder %s53, %s69
      %p71 = scmp.eq.s32.totalorder %s31, 0
      %p72 = por %p70, %p71
      %s73 = ssub.s32 %s32, %s44
      %p74 = scmp.eq.s32.totalorder %s73, 0
      %s76 = sadd.s32 %s75, 1
      %s77 = scalar_select %p74, %s75, %s76
      %p80 = pneg %p74
      %p81 = scmp.eq.s32.totalorder %s25, 1
      %p82 = por %p80, %p81
      %p83 = scmp.ne.s32.totalorder %s75, %s78
      %p84 = scmp.eq.s32.totalorder %s25, 0
      %p85 = por %p83, %p84
      %p86 = scmp.ne.s32.totalorder %s75, %s78
      %p87 = scmp.eq.s32.totalorder %s30, 1
      %p88 = por %p86, %p87
      %p89 = scmp.ne.s32.totalorder %s78, %s79
      %p90 = scmp.eq.s32.totalorder %s30, 0
      %p91 = por %p89, %p90
      %p92 = scmp.ne.s32.totalorder %s78, %s79
      %p93 = scmp.eq.s32.totalorder %s31, 1
      %p94 = por %p92, %p93
      %p96 = scmp.ne.s32.totalorder %s79, %s95
      %p97 = scmp.eq.s32.totalorder %s31, 0
      %p98 = por %p96, %p97
      %s99 = ssub.s32 %s32, %s44
      %p100 = scmp.eq.s32.totalorder %s99, 0
      %s102 = sadd.s32 %s101, 1
      %s103 = scalar_select %p100, %s101, %s102
      %p106 = pneg %p100
      %p107 = scmp.eq.s32.totalorder %s25, 1
      %p108 = por %p106, %p107
      %p109 = scmp.ne.s32.totalorder %s101, %s104
      %p110 = scmp.eq.s32.totalorder %s25, 0
      %p111 = por %p109, %p110
      %p112 = scmp.ne.s32.totalorder %s101, %s104
      %p113 = scmp.eq.s32.totalorder %s30, 1
      %p114 = por %p112, %p113
      %p115 = scmp.ne.s32.totalorder %s104, %s105
      %p116 = scmp.eq.s32.totalorder %s30, 0
      %p117 = por %p115, %p116
      %p118 = scmp.ne.s32.totalorder %s104, %s105
      %p119 = scmp.eq.s32.totalorder %s31, 1
      %p120 = por %p118, %p119
      %p122 = scmp.ne.s32.totalorder %s105, %s121
      %p123 = scmp.eq.s32.totalorder %s31, 0
      %p124 = por %p122, %p123
      %s126 = sadd.s32 %s125, 1
      %p129 = scmp.eq.s32.totalorder %s25, 1
      %p130 = scmp.ne.s32.totalorder %s125, %s127
      %p131 = scmp.eq.s32.totalorder %s25, 0
      %p132 = por %p130, %p131
      %p133 = scmp.ne.s32.totalorder %s125, %s127
      %p134 = scmp.eq.s32.totalorder %s30, 1
      %p135 = por %p133, %p134
      %p136 = scmp.ne.s32.totalorder %s127, %s128
      %p137 = scmp.eq.s32.totalorder %s30, 0
      %p138 = por %p136, %p137
      %p139 = scmp.ne.s32.totalorder %s127, %s128
      %p140 = scmp.eq.s32.totalorder %s31, 1
      %p141 = por %p139, %p140
      %p143 = scmp.ne.s32.totalorder %s128, %s142
      %p144 = scmp.eq.s32.totalorder %s31, 0
      %p145 = por %p143, %p144
      %s147 = sadd.s32 %s146, 1
      %p150 = scmp.eq.s32.totalorder %s25, 1
      %p151 = scmp.ne.s32.totalorder %s146, %s148
      %p152 = scmp.eq.s32.totalorder %s25, 0
      %p153 = por %p151, %p152
      %p154 = scmp.ne.s32.totalorder %s146, %s148
      %p155 = scmp.eq.s32.totalorder %s30, 1
      %p156 = por %p154, %p155
      %p157 = scmp.ne.s32.totalorder %s148, %s149
      %p158 = scmp.eq.s32.totalorder %s30, 0
      %p159 = por %p157, %p158
      %p160 = scmp.ne.s32.totalorder %s148, %s149
      %p161 = scmp.eq.s32.totalorder %s31, 1
      %p162 = por %p160, %p161
      %p164 = scmp.ne.s32.totalorder %s149, %s163
      %p165 = scmp.eq.s32.totalorder %s31, 0
      %p166 = por %p164, %p165
      %s168 = sadd.s32 %s167, 1
      %p171 = scmp.eq.s32.totalorder %s25, 1
      %p172 = scmp.ne.s32.totalorder %s167, %s169
      %p173 = scmp.eq.s32.totalorder %s25, 0
      %p174 = por %p172, %p173
      %p175 = scmp.ne.s32.totalorder %s167, %s169
      %p176 = scmp.eq.s32.totalorder %s30, 1
      %p177 = por %p175, %p176
      %p178 = scmp.ne.s32.totalorder %s169, %s170
      %p179 = scmp.eq.s32.totalorder %s30, 0
      %p180 = por %p178, %p179
      %p181 = scmp.ne.s32.totalorder %s169, %s170
      %p182 = scmp.eq.s32.totalorder %s31, 1
      %p183 = por %p181, %p182
      %p185 = scmp.ne.s32.totalorder %s170, %s184
      %p186 = scmp.eq.s32.totalorder %s31, 0
      %p187 = por %p185, %p186
      %s189 = sadd.s32 %s188, 1
      %p192 = scmp.eq.s32.totalorder %s25, 1
      %p193 = scmp.ne.s32.totalorder %s188, %s190
      %p194 = scmp.eq.s32.totalorder %s25, 0
      %p195 = por %p193, %p194
      %p196 = scmp.ne.s32.totalorder %s188, %s190
      %p197 = scmp.eq.s32.totalorder %s30, 1
      %p198 = por %p196, %p197
      %p199 = scmp.ne.s32.totalorder %s190, %s191
      %p200 = scmp.eq.s32.totalorder %s30, 0
      %p201 = por %p199, %p200
      %p202 = scmp.ne.s32.totalorder %s190, %s191
      %p203 = scmp.eq.s32.totalorder %s31, 1
      %p204 = por %p202, %p203
      %p206 = scmp.ne.s32.totalorder %s191, %s205
      %p207 = scmp.eq.s32.totalorder %s31, 0
      %p208 = por %p206, %p207
      %s210 = sadd.s32 %s209, 1
      %p213 = scmp.eq.s32.totalorder %s25, 1
      %p214 = scmp.ne.s32.totalorder %s209, %s211
      %p215 = scmp.eq.s32.totalorder %s25, 0
      %p216 = por %p214, %p215
      %p217 = scmp.ne.s32.totalorder %s209, %s211
      %p218 = scmp.eq.s32.totalorder %s30, 1
      %p219 = por %p217, %p218
      %p220 = scmp.ne.s32.totalorder %s211, %s212
      %p221 = scmp.eq.s32.totalorder %s30, 0
      %p222 = por %p220, %p221
      %p223 = scmp.ne.s32.totalorder %s211, %s212
      %p224 = scmp.eq.s32.totalorder %s31, 1
      %p225 = por %p223, %p224
      %p227 = scmp.ne.s32.totalorder %s212, %s226
      %p228 = scmp.eq.s32.totalorder %s31, 0
      %p229 = por %p227, %p228
      %s230 = ssub.s32 %s32, %s44
      %s231 = ssub.s32 %s33, %s40
      %s232 = sor.u32 %s230, %s231
      %p233 = scmp.eq.s32.totalorder %s232, 0
      %s235 = sadd.s32 %s234, 1
      %s236 = scalar_select %p233, %s234, %s235
      %p239 = pneg %p233
      %p240 = scmp.eq.s32.totalorder %s25, 1
      %p241 = por %p239, %p240
      %p242 = scmp.ne.s32.totalorder %s234, %s237
      %p243 = scmp.eq.s32.totalorder %s25, 0
      %p244 = por %p242, %p243
      %p245 = scmp.ne.s32.totalorder %s234, %s237
      %p246 = scmp.eq.s32.totalorder %s30, 1
      %p247 = por %p245, %p246
      %p248 = scmp.ne.s32.totalorder %s237, %s238
      %p249 = scmp.eq.s32.totalorder %s30, 0
      %p250 = por %p248, %p249
      %p251 = scmp.ne.s32.totalorder %s237, %s238
      %p252 = scmp.eq.s32.totalorder %s31, 1
      %p253 = por %p251, %p252
      %p255 = scmp.ne.s32.totalorder %s238, %s254
      %p256 = scmp.eq.s32.totalorder %s31, 0
      %p257 = por %p255, %p256
      %p258 = scmp.le.s32.totalorder 1, %s25
      %p259 = scmp.lt.s32.totalorder %s25, 3
      %p260 = pnand %p258, %p259
      %p261 = pneg %p260
      // Predicated region
      $region9: #{multi_head_seq_attention.1} parent=5 // pred_check
        _
      $region10: #{multi_head_seq_attention.1} parent=5 // pred_check_branch
        %263 = sbr.rel (%p260) target = $region12
      $region11: #{multi_head_seq_attention.1} parent=5 // pred_region
        %s264 = ssub.s32 %s25, 1
        // Predicated region
        $region13: #{multi_head_seq_attention.1} parent=11 // pred_check
          %p265 = pneg %p138
        $region14: #{multi_head_seq_attention.1} parent=11 // pred_check_branch
          %267 = sbr.rel (%p265) target = $region16
        $region15: #{multi_head_seq_attention.1} parent=11 // pred_region
          %s269 = ssub.s32 512, 512
          %270 = vsyncadd [#allocation7], %s269
          %s271 = sshll.u32 [#allocation8], 4
          %s272 = int_to_ptr.vmem [resolvable:$true] %s271
          %277 = dma.hbm_to_vmem [thread:$0]  %s3, 512, %s272, [#allocation7], 128, 128, 8
        $region16: #{multi_head_seq_attention.1} parent=11 // pred_fallthru
          _
        // Predicated region
        $region17: #{multi_head_seq_attention.1} parent=11 // pred_check
          %p278 = pneg %p159
        $region18: #{multi_head_seq_attention.1} parent=11 // pred_check_branch
          %280 = sbr.rel (%p278) target = $region20
        $region19: #{multi_head_seq_attention.1} parent=11 // pred_region
          %s282 = ssub.s32 512, 512
          %283 = vsyncadd [#allocation10], %s282
          %s284 = sshll.u32 [#allocation9], 4
          %s285 = int_to_ptr.vmem [resolvable:$true] %s284
          %290 = dma.hbm_to_vmem [thread:$0]  %s4, 512, %s285, [#allocation10], 128, 128, 8
        $region20: #{multi_head_seq_attention.1} parent=11 // pred_fallthru
          _
        // Predicated region
        $region21: #{multi_head_seq_attention.1} parent=11 // pred_check
          %p291 = pneg %p180
        $region22: #{multi_head_seq_attention.1} parent=11 // pred_check_branch
          %293 = sbr.rel (%p291) target = $region24
        $region23: #{multi_head_seq_attention.1} parent=11 // pred_region
          %s295 = ssub.s32 512, 512
          %296 = vsyncadd [#allocation10], %s295
          %s297 = sshll.u32 [#allocation11], 4
          %s298 = int_to_ptr.vmem [resolvable:$true] %s297
          %303 = dma.hbm_to_vmem [thread:$0]  %s5, 512, %s298, [#allocation10], 128, 128, 8
        $region24: #{multi_head_seq_attention.1} parent=11 // pred_fallthru
          _
        // Predicated region
        $region25: #{multi_head_seq_attention.1} parent=11 // pred_check
          %p304 = pneg %p201
        $region26: #{multi_head_seq_attention.1} parent=11 // pred_check_branch
          %306 = sbr.rel (%p304) target = $region28
        $region27: #{multi_head_seq_attention.1} parent=11 // pred_region
          %s308 = ssub.s32 512, 512
          %309 = vsyncadd [#allocation13], %s308
          %s310 = sshll.u32 [#allocation12], 4
          %s311 = int_to_ptr.vmem [resolvable:$true] %s310
          %316 = dma.hbm_to_vmem [thread:$0]  %s6, 512, %s311, [#allocation13], 128, 128, 8
        $region28: #{multi_head_seq_attention.1} parent=11 // pred_fallthru
          _
        // Predicated region
        $region29: #{multi_head_seq_attention.1} parent=11 // pred_check
          %p317 = pneg %p222
        $region30: #{multi_head_seq_attention.1} parent=11 // pred_check_branch
          %319 = sbr.rel (%p317) target = $region32
        $region31: #{multi_head_seq_attention.1} parent=11 // pred_region
          %s321 = ssub.s32 128, 128
          %322 = vsyncadd [#allocation13], %s321
          %s324 = sshll.u32 [#allocation14], 4
          %s325 = int_to_ptr.vmem [resolvable:$true] %s324
          %327 = dma.hbm_to_vmem [thread:$0]  %s7, 128, %s325, [#allocation13]
        $region32: #{multi_head_seq_attention.1} parent=11 // pred_fallthru
          _
      $region12: #{multi_head_seq_attention.1} parent=5 // pred_fallthru
        _
      %p328 = scmp.lt.s32.totalorder %s25, 2
      // Predicated region
      $region33: #{multi_head_seq_attention.1} parent=5 // pred_check
        %p329 = pneg %p328
      $region34: #{multi_head_seq_attention.1} parent=5 // pred_check_branch
        %331 = sbr.rel (%p329) target = $region36
      $region35: #{multi_head_seq_attention.1} parent=5 // pred_region
        // Predicated region
        $region37: #{multi_head_seq_attention.1} parent=35 // pred_check
          %p332 = pneg %p59
        $region38: #{multi_head_seq_attention.1} parent=35 // pred_check_branch
          %334 = sbr.rel (%p332) target = $region40
        $region39: #{multi_head_seq_attention.1} parent=35 // pred_region
          %p335 = scmp.lt.s32.totalorder %s32, 1
          %s336 = scalar_select %p335, %s32, 1
          %p337 = scmp.lt.s32.totalorder %s33, 0
          %s338 = scalar_select %p337, %s33, 0
          %s339 = sadd.s32 %s338, %s336
          %s340 = smul.addr %s339, 8
          %s341 = scalar_lea.vmem %s0, %s340
        $region40: #{multi_head_seq_attention.1} parent=35 // pred_fallthru
          _
        // Predicated region
        $region41: #{multi_head_seq_attention.1} parent=35 // pred_check
          %p342 = pneg %p85
        $region42: #{multi_head_seq_attention.1} parent=35 // pred_check_branch
          %344 = sbr.rel (%p342) target = $region44
        $region43: #{multi_head_seq_attention.1} parent=35 // pred_region
          %s345 = sand.u32 %s75, 1
          %s346 = scalar_lea.sflag [#allocation4], %s345
          %s347 = sand.u32 %s75, 1
          %s348 = smul.addr %s347, 32
          %s349 = scalar_lea.vmem [#allocation3], %s348
          %s351 = ssub.s32 512, 512
          %352 = vsyncadd %s346, %s351
          %s353 = smul.addr %s32, 4
          %s354 = smul.addr %s353, 128
          %s355 = scalar_lea.hbm %s1, %s354
          %s356 = sshll.u32 %s349, 4
          %s357 = int_to_ptr.vmem [resolvable:$true] %s356
          %362 = dma.hbm_to_vmem [thread:$0]  %s355, 512, %s357, %s346, 128, 128, 8
        $region44: #{multi_head_seq_attention.1} parent=35 // pred_fallthru
          _
        // Predicated region
        $region45: #{multi_head_seq_attention.1} parent=35 // pred_check
          %p363 = pneg %p111
        $region46: #{multi_head_seq_attention.1} parent=35 // pred_check_branch
          %365 = sbr.rel (%p363) target = $region48
        $region47: #{multi_head_seq_attention.1} parent=35 // pred_region
          %s366 = sand.u32 %s25, 1
          %s367 = scalar_lea.sflag [#allocation7], %s366
          %s368 = sand.u32 %s101, 1
          %s369 = smul.addr %s368, 32
          %s370 = scalar_lea.vmem [#allocation6], %s369
          %s372 = ssub.s32 512, 512
          %373 = vsyncadd %s367, %s372
          %s374 = smul.addr %s32, 4
          %s375 = smul.addr %s374, 128
          %s376 = scalar_lea.hbm %s2, %s375
          %s377 = sshll.u32 %s370, 4
          %s378 = int_to_ptr.vmem [resolvable:$true] %s377
          %383 = dma.hbm_to_vmem [thread:$0]  %s376, 512, %s378, %s367, 128, 128, 8
        $region48: #{multi_head_seq_attention.1} parent=35 // pred_fallthru
          _
      $region36: #{multi_head_seq_attention.1} parent=5 // pred_fallthru
        _
      %p384 = scmp.le.s32.totalorder 1, %s25
      %p385 = scmp.lt.s32.totalorder %s25, 3
      %p386 = pnand %p384, %p385
      %p387 = pneg %p386
      // Predicated region
      $region49: #{multi_head_seq_attention.1} parent=5 // pred_check
        _
      $region50: #{multi_head_seq_attention.1} parent=5 // pred_check_branch
        %389 = sbr.rel (%p386) target = $region52
      $region51: #{multi_head_seq_attention.1} parent=5 // pred_region
        %s390 = ssub.s32 %s25, 1
        %s391 = sand.u32 %s78, 1
        %s392 = scalar_lea.sflag [#allocation4], %s391
        %s393 = sand.u32 %s78, 1
        %s394 = smul.addr %s393, 32
        %s395 = scalar_lea.vmem [#allocation3], %s394
        // Predicated region
        $region53: #{multi_head_seq_attention.1} parent=51 // pred_check
          %p396 = pneg %p91
        $region54: #{multi_head_seq_attention.1} parent=51 // pred_check_branch
          %398 = sbr.rel (%p396) target = $region56
        $region55: #{multi_head_seq_attention.1} parent=51 // pred_region
          %399 = dma.done %s392, 512
        $region56: #{multi_head_seq_attention.1} parent=51 // pred_fallthru
          _
        %s400 = sand.u32 %s30, 1
        %s401 = scalar_lea.sflag [#allocation7], %s400
        %s402 = sand.u32 %s104, 1
        %s403 = smul.addr %s402, 32
        %s404 = scalar_lea.vmem [#allocation6], %s403
        // Predicated region
        $region57: #{multi_head_seq_attention.1} parent=51 // pred_check
          %p405 = pneg %p117
        $region58: #{multi_head_seq_attention.1} parent=51 // pred_check_branch
          %407 = sbr.rel (%p405) target = $region60
        $region59: #{multi_head_seq_attention.1} parent=51 // pred_region
          %408 = dma.done %s401, 512
        $region60: #{multi_head_seq_attention.1} parent=51 // pred_fallthru
          _
        // Predicated region
        $region61: #{multi_head_seq_attention.1} parent=51 // pred_check
          %p409 = pneg %p138
        $region62: #{multi_head_seq_attention.1} parent=51 // pred_check_branch
          %411 = sbr.rel (%p409) target = $region64
        $region63: #{multi_head_seq_attention.1} parent=51 // pred_region
          %412 = dma.done [#allocation7], 512
        $region64: #{multi_head_seq_attention.1} parent=51 // pred_fallthru
          _
        // Predicated region
        $region65: #{multi_head_seq_attention.1} parent=51 // pred_check
          %p413 = pneg %p159
        $region66: #{multi_head_seq_attention.1} parent=51 // pred_check_branch
          %415 = sbr.rel (%p413) target = $region68
        $region67: #{multi_head_seq_attention.1} parent=51 // pred_region
          %416 = dma.done [#allocation10], 512
        $region68: #{multi_head_seq_attention.1} parent=51 // pred_fallthru
          _
        // Predicated region
        $region69: #{multi_head_seq_attention.1} parent=51 // pred_check
          %p417 = pneg %p180
        $region70: #{multi_head_seq_attention.1} parent=51 // pred_check_branch
          %419 = sbr.rel (%p417) target = $region72
        $region71: #{multi_head_seq_attention.1} parent=51 // pred_region
          %420 = dma.done [#allocation10], 512
        $region72: #{multi_head_seq_attention.1} parent=51 // pred_fallthru
          _
        // Predicated region
        $region73: #{multi_head_seq_attention.1} parent=51 // pred_check
          %p421 = pneg %p201
        $region74: #{multi_head_seq_attention.1} parent=51 // pred_check_branch
          %423 = sbr.rel (%p421) target = $region76
        $region75: #{multi_head_seq_attention.1} parent=51 // pred_region
          %424 = dma.done [#allocation13], 512
        $region76: #{multi_head_seq_attention.1} parent=51 // pred_fallthru
          _
        // Predicated region
        $region77: #{multi_head_seq_attention.1} parent=51 // pred_check
          %p425 = pneg %p222
        $region78: #{multi_head_seq_attention.1} parent=51 // pred_check_branch
          %427 = sbr.rel (%p425) target = $region80
        $region79: #{multi_head_seq_attention.1} parent=51 // pred_region
          %428 = dma.done [#allocation13], 128
        $region80: #{multi_head_seq_attention.1} parent=51 // pred_fallthru
          _
        %p429 = scmp.lt.s32.totalorder %s34, 1
        %s430 = scalar_select %p429, %s34, 1
        %p431 = scmp.lt.s32.totalorder %s35, 0
        %s432 = scalar_select %p431, %s35, 0
        %s433 = sadd.s32 %s432, %s430
        %s434 = smul.addr %s433, 8
        %s435 = scalar_lea.vmem %s0, %s434
        %p436 = pneg %p65
        %p437 = pneg %p62
        %s438 = sand.u32 %s78, 1
        %s439 = scalar_lea.sflag [#allocation4], %s438
        %s440 = sand.u32 %s78, 1
        %s441 = smul.addr %s440, 32
        %s442 = scalar_lea.vmem [#allocation3], %s441
        %p443 = pneg %p91
        %p444 = pneg %p88
        %s445 = sand.u32 %s30, 1
        %s446 = scalar_lea.sflag [#allocation7], %s445
        %s447 = sand.u32 %s104, 1
        %s448 = smul.addr %s447, 32
        %s449 = scalar_lea.vmem [#allocation6], %s448
        %p450 = pneg %p117
        %p451 = pneg %p114
        %p452 = pneg %p138
        %p453 = pneg %p135
        %p454 = pneg %p159
        %p455 = pneg %p156
        %p456 = pneg %p180
        %p457 = pneg %p177
        %p458 = pneg %p201
        %p459 = pneg %p198
        %p460 = pneg %p222
        %p461 = pneg %p219
        %p462 = pneg %p250
        %p463 = pneg %p247
        %s464 = sand.u32 %s237, 1
        %s465 = scalar_lea.sflag [#allocation5], %s464
        %s466 = sand.u32 %s237, 1
        %s467 = smul.addr %s466, 8
        %s468 = scalar_lea.vmem [#allocation15], %s467
        %p469 = scmp.lt.s32.totalorder %s34, 1
        %s470 = scalar_select %p469, %s34, 1
        %p471 = scmp.lt.s32.totalorder %s35, 0
        %s472 = scalar_select %p471, %s35, 0
        %s473 = sadd.s32 %s472, %s470
        %s474 = smul.addr %s473, 8
        %s475 = scalar_lea.vmem %s0, %s474
        %s476 = smul.u32 %s35, 8
        %v477 = vld [vmem:[%s475] sm:$0xff]
        %s478 = scalar_lea.vmem %s395, %s476 [#allocation3]
        %v479 = vld [vmem:[%s478] sm:$0xff]
        %v480 = vld [vmem:[%s478 + $0x8] sm:$0xff]
        %v481 = vld [vmem:[%s478 + $0x10] sm:$0xff]
        %v482 = vld [vmem:[%s478 + $0x18] sm:$0xff]
        %s483 = scalar_lea.vmem %s404, %s476 [#allocation6]
        %v484 = vld [vmem:[%s483] sm:$0xff]
        %v485 = vld [vmem:[%s483 + $0x8] sm:$0xff]
        %v486 = vld [vmem:[%s483 + $0x10] sm:$0xff]
        %v487 = vld [vmem:[%s483 + $0x18] sm:$0xff]
        %v488 = vld [vmem:[#allocation12] sm:$0xff]
        %v489 = vld [vmem:[#allocation12 + $0x8] sm:$0xff]
        %v490 = vld [vmem:[#allocation12 + $0x10] sm:$0xff]
        %v491 = vld [vmem:[#allocation12 + $0x18] sm:$0xff]
        %v492 = vld [vmem:[#allocation14] sm:$0xff]
        %v493 = vld [vmem:[#allocation8] sm:$0xff]
        %v494 = vld [vmem:[#allocation8 + $0x8] sm:$0xff]
        %v495 = vld [vmem:[#allocation8 + $0x10] sm:$0xff]
        %v496 = vld [vmem:[#allocation8 + $0x18] sm:$0xff]
        %vm497 = vcmask 261120
        %v499 = vsel %vm497, %v477, 0
        %501 = vmatprep.subr.mxu0 0.0
        %502 = vmatpush1.msra.mxu0 %v493
        %503 = vmatprep.subr.mxu0 0.0
        %504 = vmatpush1.msra.mxu0 %v494
        %505 = vmatprep.subr.mxu0 0.0
        %506 = vmatpush1.msra.mxu0 %v495
        %507 = vmatprep.subr.mxu0 0.0
        %508 = vmatpush1.msra.mxu0 %v496
        %509 = vmatprep.subr.mxu0 0.0
        %510 = vmatpush1.msra.mxu0 0.0
        %511 = vmatprep.subr.mxu0 0.0
        %512 = vmatpush1.msra.mxu0 0.0
        %513 = vmatprep.subr.mxu0 0.0
        %514 = vmatpush1.msra.mxu0 0.0
        %515 = vmatprep.subr.mxu0 0.0
        %516 = vmatpush1.msra.mxu0 0.0
        %517 = vmatprep.subr.mxu0 0.0
        %518 = vmatpush1.msra.mxu0 0.0
        %519 = vmatprep.subr.mxu0 0.0
        %520 = vmatpush1.msra.mxu0 0.0
        %521 = vmatprep.subr.mxu0 0.0
        %522 = vmatpush1.msra.mxu0 0.0
        %523 = vmatprep.subr.mxu0 0.0
        %524 = vmatpush1.msra.mxu0 0.0
        %525 = vmatprep.subr.mxu0 0.0
        %526 = vmatpush1.msra.mxu0 0.0
        %527 = vmatprep.subr.mxu0 0.0
        %528 = vmatpush1.msra.mxu0 0.0
        %529 = vmatprep.subr.mxu0 0.0
        %530 = vmatpush1.msra.mxu0 0.0
        %531 = vmatprep.subr.mxu0 0.0
        %532 = vmatpush1.msra.mxu0 0.0
        %533 = vmatprep.subr.mxu0 0.0
        %534 = vmatpush1.msra.mxu0 0.0
        %535 = vmatprep.subr.mxu0 0.0
        %536 = vmatpush1.msra.mxu0 0.0
        %537 = vmatprep.subr.mxu0 0.0
        %538 = vmatpush1.msra.mxu0 0.0
        %539 = vmatprep.subr.mxu0 0.0
        %540 = vmatpush1.msra.mxu0 0.0
        %541 = vmatprep.subr.mxu0 0.0
        %542 = vmatpush1.msra.mxu0 0.0
        %543 = vmatprep.subr.mxu0 0.0
        %544 = vmatpush1.msra.mxu0 0.0
        %545 = vmatprep.subr.mxu0 0.0
        %546 = vmatpush1.msra.mxu0 0.0
        %547 = vmatprep.subr.mxu0 0.0
        %548 = vmatpush1.msra.mxu0 0.0
        %549 = vmatprep.subr.mxu0 0.0
        %550 = vmatpush1.msra.mxu0 0.0
        %551 = vmatprep.subr.mxu0 0.0
        %552 = vmatpush1.msra.mxu0 0.0
        %553 = vmatprep.subr.mxu0 0.0
        %554 = vmatpush1.msra.mxu0 0.0
        %555 = vmatprep.subr.mxu0 0.0
        %556 = vmatpush1.msra.mxu0 0.0
        %557 = vmatprep.subr.mxu0 0.0
        %558 = vmatpush1.msra.mxu0 0.0
        %559 = vmatprep.subr.mxu0 0.0
        %560 = vmatpush1.msra.mxu0 0.0
        %561 = vmatprep.subr.mxu0 0.0
        %562 = vmatpush1.msra.mxu0 0.0
        %563 = vmatprep.subr.mxu0 0.0
        %564 = vmatpush1.msra.mxu0 0.0
        %565 = vmatprep.mubr.f32.mxu0 0.0
        %566 = vmatmul.mubr.f32.gmra.mrb[0].mxu0 %v499
        %v567 = vpop.f32.mrb[0].mxu0
        %v568 = vadd.f32 0.0, %v567
        %v569 = vpop.f32.mrb[0].mxu0
        %570 = vdwg.mxu0
        %v571 = vmul.f32 %v568, 0.35355338
        %v572 = vld [vmem:[#allocation9] sm:$0xff]
        %v573 = vld [vmem:[#allocation9 + $0x8] sm:$0xff]
        %v574 = vld [vmem:[#allocation9 + $0x10] sm:$0xff]
        %v575 = vld [vmem:[#allocation9 + $0x18] sm:$0xff]
        %v577 = vsel %vm497, %v479, 0
        %v580 = vsel %vm497, %v480, 0
        %v583 = vsel %vm497, %v481, 0
        %v586 = vsel %vm497, %v482, 0
        %588 = vmatprep.subr.mxu0 0.0
        %589 = vmatpush1.msra.mxu0 %v572
        %590 = vmatprep.subr.mxu0 0.0
        %591 = vmatpush1.msra.mxu0 %v573
        %592 = vmatprep.subr.mxu0 0.0
        %593 = vmatpush1.msra.mxu0 %v574
        %594 = vmatprep.subr.mxu0 0.0
        %595 = vmatpush1.msra.mxu0 %v575
        %596 = vmatprep.subr.mxu0 0.0
        %597 = vmatpush1.msra.mxu0 0.0
        %598 = vmatprep.subr.mxu0 0.0
        %599 = vmatpush1.msra.mxu0 0.0
        %600 = vmatprep.subr.mxu0 0.0
        %601 = vmatpush1.msra.mxu0 0.0
        %602 = vmatprep.subr.mxu0 0.0
        %603 = vmatpush1.msra.mxu0 0.0
        %604 = vmatprep.subr.mxu0 0.0
        %605 = vmatpush1.msra.mxu0 0.0
        %606 = vmatprep.subr.mxu0 0.0
        %607 = vmatpush1.msra.mxu0 0.0
        %608 = vmatprep.subr.mxu0 0.0
        %609 = vmatpush1.msra.mxu0 0.0
        %610 = vmatprep.subr.mxu0 0.0
        %611 = vmatpush1.msra.mxu0 0.0
        %612 = vmatprep.subr.mxu0 0.0
        %613 = vmatpush1.msra.mxu0 0.0
        %614 = vmatprep.subr.mxu0 0.0
        %615 = vmatpush1.msra.mxu0 0.0
        %616 = vmatprep.subr.mxu0 0.0
        %617 = vmatpush1.msra.mxu0 0.0
        %618 = vmatprep.subr.mxu0 0.0
        %619 = vmatpush1.msra.mxu0 0.0
        %620 = vmatprep.subr.mxu0 0.0
        %621 = vmatpush1.msra.mxu0 0.0
        %622 = vmatprep.subr.mxu0 0.0
        %623 = vmatpush1.msra.mxu0 0.0
        %624 = vmatprep.subr.mxu0 0.0
        %625 = vmatpush1.msra.mxu0 0.0
        %626 = vmatprep.subr.mxu0 0.0
        %627 = vmatpush1.msra.mxu0 0.0
        %628 = vmatprep.subr.mxu0 0.0
        %629 = vmatpush1.msra.mxu0 0.0
        %630 = vmatprep.subr.mxu0 0.0
        %631 = vmatpush1.msra.mxu0 0.0
        %632 = vmatprep.subr.mxu0 0.0
        %633 = vmatpush1.msra.mxu0 0.0
        %634 = vmatprep.subr.mxu0 0.0
        %635 = vmatpush1.msra.mxu0 0.0
        %636 = vmatprep.subr.mxu0 0.0
        %637 = vmatpush1.msra.mxu0 0.0
        %638 = vmatprep.subr.mxu0 0.0
        %639 = vmatpush1.msra.mxu0 0.0
        %640 = vmatprep.subr.mxu0 0.0
        %641 = vmatpush1.msra.mxu0 0.0
        %642 = vmatprep.subr.mxu0 0.0
        %643 = vmatpush1.msra.mxu0 0.0
        %644 = vmatprep.subr.mxu0 0.0
        %645 = vmatpush1.msra.mxu0 0.0
        %646 = vmatprep.subr.mxu0 0.0
        %647 = vmatpush1.msra.mxu0 0.0
        %648 = vmatprep.subr.mxu0 0.0
        %649 = vmatpush1.msra.mxu0 0.0
        %650 = vmatprep.subr.mxu0 0.0
        %651 = vmatpush1.msra.mxu0 0.0
        %652 = vmatprep.mubr.f32.mxu0 0.0
        %653 = vmatmul.mubr.f32.gmra.mrb[0].mxu0 %v577
        %v654 = vpop.f32.mrb[0].mxu0
        %v655 = vadd.f32 0.0, %v654
        %v656 = vpop.f32.mrb[0].mxu0
        %657 = vmatprep.mubr.f32.mxu0 0.0
        %658 = vmatmul.mubr.f32.gmra.mrb[0].mxu0 %v580
        %v659 = vpop.f32.mrb[0].mxu0
        %v660 = vadd.f32 0.0, %v659
        %v661 = vpop.f32.mrb[0].mxu0
        %662 = vmatprep.mubr.f32.mxu0 0.0
        %663 = vmatmul.mubr.f32.gmra.mrb[0].mxu0 %v583
        %v664 = vpop.f32.mrb[0].mxu0
        %v665 = vadd.f32 0.0, %v664
        %v666 = vpop.f32.mrb[0].mxu0
        %667 = vmatprep.mubr.f32.mxu0 0.0
        %668 = vmatmul.mubr.f32.gmra.mrb[0].mxu0 %v586
        %v669 = vpop.f32.mrb[0].mxu0
        %v670 = vadd.f32 0.0, %v669
        %v671 = vpop.f32.mrb[0].mxu0
        %672 = vdwg.mxu0
        %v673 = vld [vmem:[#allocation11] sm:$0xff]
        %v674 = vld [vmem:[#allocation11 + $0x8] sm:$0xff]
        %v675 = vld [vmem:[#allocation11 + $0x10] sm:$0xff]
        %v676 = vld [vmem:[#allocation11 + $0x18] sm:$0xff]
        %v678 = vsel %vm497, %v484, 0
        %v681 = vsel %vm497, %v485, 0
        %v684 = vsel %vm497, %v486, 0
        %v687 = vsel %vm497, %v487, 0
        %689 = vmatprep.subr.mxu0 0.0
        %690 = vmatpush1.msra.mxu0 %v673
        %691 = vmatprep.subr.mxu0 0.0
        %692 = vmatpush1.msra.mxu0 %v674
        %693 = vmatprep.subr.mxu0 0.0
        %694 = vmatpush1.msra.mxu0 %v675
        %695 = vmatprep.subr.mxu0 0.0
        %696 = vmatpush1.msra.mxu0 %v676
        %697 = vmatprep.subr.mxu0 0.0
        %698 = vmatpush1.msra.mxu0 0.0
        %699 = vmatprep.subr.mxu0 0.0
        %700 = vmatpush1.msra.mxu0 0.0
        %701 = vmatprep.subr.mxu0 0.0
        %702 = vmatpush1.msra.mxu0 0.0
        %703 = vmatprep.subr.mxu0 0.0
        %704 = vmatpush1.msra.mxu0 0.0
        %705 = vmatprep.subr.mxu0 0.0
        %706 = vmatpush1.msra.mxu0 0.0
        %707 = vmatprep.subr.mxu0 0.0
        %708 = vmatpush1.msra.mxu0 0.0
        %709 = vmatprep.subr.mxu0 0.0
        %710 = vmatpush1.msra.mxu0 0.0
        %711 = vmatprep.subr.mxu0 0.0
        %712 = vmatpush1.msra.mxu0 0.0
        %713 = vmatprep.subr.mxu0 0.0
        %714 = vmatpush1.msra.mxu0 0.0
        %715 = vmatprep.subr.mxu0 0.0
        %716 = vmatpush1.msra.mxu0 0.0
        %717 = vmatprep.subr.mxu0 0.0
        %718 = vmatpush1.msra.mxu0 0.0
        %719 = vmatprep.subr.mxu0 0.0
        %720 = vmatpush1.msra.mxu0 0.0
        %721 = vmatprep.subr.mxu0 0.0
        %722 = vmatpush1.msra.mxu0 0.0
        %723 = vmatprep.subr.mxu0 0.0
        %724 = vmatpush1.msra.mxu0 0.0
        %725 = vmatprep.subr.mxu0 0.0
        %726 = vmatpush1.msra.mxu0 0.0
        %727 = vmatprep.subr.mxu0 0.0
        %728 = vmatpush1.msra.mxu0 0.0
        %729 = vmatprep.subr.mxu0 0.0
        %730 = vmatpush1.msra.mxu0 0.0
        %731 = vmatprep.subr.mxu0 0.0
        %732 = vmatpush1.msra.mxu0 0.0
        %733 = vmatprep.subr.mxu0 0.0
        %734 = vmatpush1.msra.mxu0 0.0
        %735 = vmatprep.subr.mxu0 0.0
        %736 = vmatpush1.msra.mxu0 0.0
        %737 = vmatprep.subr.mxu0 0.0
        %738 = vmatpush1.msra.mxu0 0.0
        %739 = vmatprep.subr.mxu0 0.0
        %740 = vmatpush1.msra.mxu0 0.0
        %741 = vmatprep.subr.mxu0 0.0
        %742 = vmatpush1.msra.mxu0 0.0
        %743 = vmatprep.subr.mxu0 0.0
        %744 = vmatpush1.msra.mxu0 0.0
        %745 = vmatprep.subr.mxu0 0.0
        %746 = vmatpush1.msra.mxu0 0.0
        %747 = vmatprep.subr.mxu0 0.0
        %748 = vmatpush1.msra.mxu0 0.0
        %749 = vmatprep.subr.mxu0 0.0
        %750 = vmatpush1.msra.mxu0 0.0
        %751 = vmatprep.subr.mxu0 0.0
        %752 = vmatpush1.msra.mxu0 0.0
        %753 = vmatprep.mubr.f32.mxu0 0.0
        %754 = vmatmul.mubr.f32.gmra.mrb[0].mxu0 %v678
        %v755 = vpop.f32.mrb[0].mxu0
        %v756 = vadd.f32 0.0, %v755
        %v757 = vpop.f32.mrb[0].mxu0
        %758 = vmatprep.mubr.f32.mxu0 0.0
        %759 = vmatmul.mubr.f32.gmra.mrb[0].mxu0 %v681
        %v760 = vpop.f32.mrb[0].mxu0
        %v761 = vadd.f32 0.0, %v760
        %v762 = vpop.f32.mrb[0].mxu0
        %763 = vmatprep.mubr.f32.mxu0 0.0
        %764 = vmatmul.mubr.f32.gmra.mrb[0].mxu0 %v684
        %v765 = vpop.f32.mrb[0].mxu0
        %v766 = vadd.f32 0.0, %v765
        %v767 = vpop.f32.mrb[0].mxu0
        %768 = vmatprep.mubr.f32.mxu0 0.0
        %769 = vmatmul.mubr.f32.gmra.mrb[0].mxu0 %v687
        %v770 = vpop.f32.mrb[0].mxu0
        %v771 = vadd.f32 0.0, %v770
        %v772 = vpop.f32.mrb[0].mxu0
        %773 = vdwg.mxu0
        %vm774 = vcmask 64512
        %v776 = vsel %vm774, %v571, 0
        %v779 = vsel %vm774, %v655, 0
        %v782 = vsel %vm774, %v660, 0
        %v785 = vsel %vm774, %v665, 0
        %v788 = vsel %vm774, %v670, 0
        %790 = vmatprep.subr.mxu0 0.0
        %791 = vmatpush1.xpose.msra.mxu0 %v779
        %792 = vmatprep.subr.mxu0 0.0
        %793 = vmatpush1.xpose.msra.mxu0 %v782
        %794 = vmatprep.subr.mxu0 0.0
        %795 = vmatpush1.xpose.msra.mxu0 %v785
        %796 = vmatprep.subr.mxu0 0.0
        %797 = vmatpush1.xpose.msra.mxu0 %v788
        %798 = vmatprep.subr.mxu0 0.0
        %799 = vmatpush1.xpose.msra.mxu0 0.0
        %800 = vmatprep.subr.mxu0 0.0
        %801 = vmatpush1.xpose.msra.mxu0 0.0
        %802 = vmatprep.subr.mxu0 0.0
        %803 = vmatpush1.xpose.msra.mxu0 0.0
        %804 = vmatprep.subr.mxu0 0.0
        %805 = vmatpush1.xpose.msra.mxu0 0.0
        %806 = vmatprep.subr.mxu0 0.0
        %807 = vmatpush1.xpose.msra.mxu0 0.0
        %808 = vmatprep.subr.mxu0 0.0
        %809 = vmatpush1.xpose.msra.mxu0 0.0
        %810 = vmatprep.subr.mxu0 0.0
        %811 = vmatpush1.xpose.msra.mxu0 0.0
        %812 = vmatprep.subr.mxu0 0.0
        %813 = vmatpush1.xpose.msra.mxu0 0.0
        %814 = vmatprep.subr.mxu0 0.0
        %815 = vmatpush1.xpose.msra.mxu0 0.0
        %816 = vmatprep.subr.mxu0 0.0
        %817 = vmatpush1.xpose.msra.mxu0 0.0
        %818 = vmatprep.subr.mxu0 0.0
        %819 = vmatpush1.xpose.msra.mxu0 0.0
        %820 = vmatprep.subr.mxu0 0.0
        %821 = vmatpush1.xpose.msra.mxu0 0.0
        %822 = vmatprep.subr.mxu0 0.0
        %823 = vmatpush1.xpose.msra.mxu0 0.0
        %824 = vmatprep.subr.mxu0 0.0
        %825 = vmatpush1.xpose.msra.mxu0 0.0
        %826 = vmatprep.subr.mxu0 0.0
        %827 = vmatpush1.xpose.msra.mxu0 0.0
        %828 = vmatprep.subr.mxu0 0.0
        %829 = vmatpush1.xpose.msra.mxu0 0.0
        %830 = vmatprep.subr.mxu0 0.0
        %831 = vmatpush1.xpose.msra.mxu0 0.0
        %832 = vmatprep.subr.mxu0 0.0
        %833 = vmatpush1.xpose.msra.mxu0 0.0
        %834 = vmatprep.subr.mxu0 0.0
        %835 = vmatpush1.xpose.msra.mxu0 0.0
        %836 = vmatprep.subr.mxu0 0.0
        %837 = vmatpush1.xpose.msra.mxu0 0.0
        %838 = vmatprep.subr.mxu0 0.0
        %839 = vmatpush1.xpose.msra.mxu0 0.0
        %840 = vmatprep.subr.mxu0 0.0
        %841 = vmatpush1.xpose.msra.mxu0 0.0
        %842 = vmatprep.subr.mxu0 0.0
        %843 = vmatpush1.xpose.msra.mxu0 0.0
        %844 = vmatprep.subr.mxu0 0.0
        %845 = vmatpush1.xpose.msra.mxu0 0.0
        %846 = vmatprep.subr.mxu0 0.0
        %847 = vmatpush1.xpose.msra.mxu0 0.0
        %848 = vmatprep.subr.mxu0 0.0
        %849 = vmatpush1.xpose.msra.mxu0 0.0
        %850 = vmatprep.subr.mxu0 0.0
        %851 = vmatpush1.xpose.msra.mxu0 0.0
        %852 = vmatprep.subr.mxu0 0.0
        %853 = vmatpush1.xpose.msra.mxu0 0.0
        %854 = vmatprep.mubr.f32.mxu0 0.0
        %855 = vmatmul.mubr.f32.gmra.mrb[0].mxu0 %v776
        %v856 = vpop.f32.mrb[0].mxu0
        %v857 = vadd.f32 0.0, %v856
        %v858 = vpop.f32.mrb[0].mxu0
        %859 = vdwg.mxu0
        %v860 = vlaneseq
        %v861 = vshrl.u32 %v860, 7
        %863 = vrot.lane.b32.xlu0 %v857, 127
        %v864 = vpop.permute.xlu0 %863
        %866 = vrot.lane.b32.xlu0 %v857, 31
        %v867 = vpop.permute.xlu0 %866
        %vm869 = vcmask 252928
        %v870 = vsel %vm869, %v864, %v867
        %v871 = vand.u32 %v861, 1
        %vm872 = vcmp.ne.s32.totalorder %v871, 0
        %v873 = vsel %vm872, 1, 0
        %vm874 = vcmp.eq.s32.totalorder %v873, 1
        %v875 = vsel %vm874, %v870, %v857
        %877 = vrot.lane.b32.xlu0 %v875, 126
        %v878 = vpop.permute.xlu0 %877
        %880 = vrot.lane.b32.xlu0 %v875, 30
        %v881 = vpop.permute.xlu0 %880
        %vm883 = vcmask 244736
        %v884 = vsel %vm883, %v878, %v881
        %v885 = vand.u32 %v861, 2
        %vm886 = vcmp.ne.s32.totalorder %v885, 0
        %v887 = vsel %vm886, 1, 0
        %vm888 = vcmp.eq.s32.totalorder %v887, 1
        %v889 = vsel %vm888, %v884, %v875
        %891 = vrot.lane.b32.xlu0 %v889, 124
        %v892 = vpop.permute.xlu0 %891
        %894 = vrot.lane.b32.xlu0 %v889, 28
        %v895 = vpop.permute.xlu0 %894
        %vm897 = vcmask 228352
        %v898 = vsel %vm897, %v892, %v895
        %v899 = vand.u32 %v861, 4
        %vm900 = vcmp.ne.s32.totalorder %v899, 0
        %v901 = vsel %vm900, 1, 0
        %vm902 = vcmp.eq.s32.totalorder %v901, 1
        %v903 = vsel %vm902, %v898, %v889
        %904 = vmatprep.subr.mxu0 0.0
        %905 = vmatpush1.msra.mxu0 %v492
        %906 = vmatprep.subr.mxu0 0.0
        %907 = vmatpush1.msra.mxu0 0.0
        %908 = vmatprep.subr.mxu0 0.0
        %909 = vmatpush1.msra.mxu0 0.0
        %910 = vmatprep.subr.mxu0 0.0
        %911 = vmatpush1.msra.mxu0 0.0
        %912 = vmatprep.subr.mxu0 0.0
        %913 = vmatpush1.msra.mxu0 0.0
        %914 = vmatprep.subr.mxu0 0.0
        %915 = vmatpush1.msra.mxu0 0.0
        %916 = vmatprep.subr.mxu0 0.0
        %917 = vmatpush1.msra.mxu0 0.0
        %918 = vmatprep.subr.mxu0 0.0
        %919 = vmatpush1.msra.mxu0 0.0
        %920 = vmatprep.subr.mxu0 0.0
        %921 = vmatpush1.msra.mxu0 0.0
        %922 = vmatprep.subr.mxu0 0.0
        %923 = vmatpush1.msra.mxu0 0.0
        %924 = vmatprep.subr.mxu0 0.0
        %925 = vmatpush1.msra.mxu0 0.0
        %926 = vmatprep.subr.mxu0 0.0
        %927 = vmatpush1.msra.mxu0 0.0
        %928 = vmatprep.subr.mxu0 0.0
        %929 = vmatpush1.msra.mxu0 0.0
        %930 = vmatprep.subr.mxu0 0.0
        %931 = vmatpush1.msra.mxu0 0.0
        %932 = vmatprep.subr.mxu0 0.0
        %933 = vmatpush1.msra.mxu0 0.0
        %934 = vmatprep.subr.mxu0 0.0
        %935 = vmatpush1.msra.mxu0 0.0
        %936 = vmatprep.subr.mxu0 0.0
        %937 = vmatpush1.msra.mxu0 0.0
        %938 = vmatprep.subr.mxu0 0.0
        %939 = vmatpush1.msra.mxu0 0.0
        %940 = vmatprep.subr.mxu0 0.0
        %941 = vmatpush1.msra.mxu0 0.0
        %942 = vmatprep.subr.mxu0 0.0
        %943 = vmatpush1.msra.mxu0 0.0
        %944 = vmatprep.subr.mxu0 0.0
        %945 = vmatpush1.msra.mxu0 0.0
        %946 = vmatprep.subr.mxu0 0.0
        %947 = vmatpush1.msra.mxu0 0.0
        %948 = vmatprep.subr.mxu0 0.0
        %949 = vmatpush1.msra.mxu0 0.0
        %950 = vmatprep.subr.mxu0 0.0
        %951 = vmatpush1.msra.mxu0 0.0
        %952 = vmatprep.subr.mxu0 0.0
        %953 = vmatpush1.msra.mxu0 0.0
        %954 = vmatprep.subr.mxu0 0.0
        %955 = vmatpush1.msra.mxu0 0.0
        %956 = vmatprep.subr.mxu0 0.0
        %957 = vmatpush1.msra.mxu0 0.0
        %958 = vmatprep.subr.mxu0 0.0
        %959 = vmatpush1.msra.mxu0 0.0
        %960 = vmatprep.subr.mxu0 0.0
        %961 = vmatpush1.msra.mxu0 0.0
        %962 = vmatprep.subr.mxu0 0.0
        %963 = vmatpush1.msra.mxu0 0.0
        %964 = vmatprep.subr.mxu0 0.0
        %965 = vmatpush1.msra.mxu0 0.0
        %966 = vmatprep.subr.mxu0 0.0
        %967 = vmatpush1.msra.mxu0 0.0
        %968 = vmatprep.mubr.f32.mxu0 0.0
        %969 = vmatmul.mubr.f32.gmra.mrb[0].mxu0 %v776
        %v970 = vpop.f32.mrb[0].mxu0
        %v971 = vadd.f32 0.0, %v970
        %v972 = vpop.f32.mrb[0].mxu0
        %973 = vdwg.mxu0
        %v974 = vadd.f32 %v903, %v971
        %vm975 = vcmask 195584
        %v976 = vsel %vm975, %v974, -inf
        %977 = vmax.xlane.f32.xlu0 %v976
        %v978 = vpop.xlane.xlu0 %977
        %v979 = vsub.f32 %v974, %v978
        %v980 = vmul.f32 %v979, 1.442695
        %v981 = vpow.pop %v980
        %v982 = vsel %vm975, %v981, 0.0
        %983 = vadd.xlane.f32.xlu0 %v982
        %v984 = vpop.xlane.xlu0 %983
        %v985 = vrcp.pop %v984
        %v986 = vmul.f32 %v981, %v985
        %v987 = vsel %vm975, %v986, 0.0
        %989 = vrot.lane.b32.xlu0 %v987, 97
        %v990 = vpop.permute.xlu0 %989
        %992 = vrot.lane.b32.xlu0 %v987, 1
        %v993 = vpop.permute.xlu0 %992
        %vm995 = vcmask 7168
        %v996 = vsel %vm995, %v990, %v993
        %v997 = vsel %vm874, %v996, %v987
        %999 = vrot.lane.b32.xlu0 %v997, 98
        %v1000 = vpop.permute.xlu0 %999
        %1002 = vrot.lane.b32.xlu0 %v997, 2
        %v1003 = vpop.permute.xlu0 %1002
        %vm1005 = vcmask 15360
        %v1006 = vsel %vm1005, %v1000, %v1003
        %v1007 = vsel %vm888, %v1006, %v997
        %1009 = vrot.lane.b32.xlu0 %v1007, 100
        %v1010 = vpop.permute.xlu0 %1009
        %1012 = vrot.lane.b32.xlu0 %v1007, 4
        %v1013 = vpop.permute.xlu0 %1012
        %vm1015 = vcmask 31744
        %v1016 = vsel %vm1015, %v1010, %v1013
        %v1017 = vsel %vm902, %v1016, %v1007
        %v1019 = vsel %vm497, %v1017, 0
        %1021 = vmatprep.subr.mxu0 0.0
        %1022 = vmatpush1.msra.mxu0 %v756
        %1023 = vmatprep.subr.mxu0 0.0
        %1024 = vmatpush1.msra.mxu0 %v761
        %1025 = vmatprep.subr.mxu0 0.0
        %1026 = vmatpush1.msra.mxu0 %v766
        %1027 = vmatprep.subr.mxu0 0.0
        %1028 = vmatpush1.msra.mxu0 %v771
        %1029 = vmatprep.subr.mxu0 0.0
        %1030 = vmatpush1.msra.mxu0 0.0
        %1031 = vmatprep.subr.mxu0 0.0
        %1032 = vmatpush1.msra.mxu0 0.0
        %1033 = vmatprep.subr.mxu0 0.0
        %1034 = vmatpush1.msra.mxu0 0.0
        %1035 = vmatprep.subr.mxu0 0.0
        %1036 = vmatpush1.msra.mxu0 0.0
        %1037 = vmatprep.subr.mxu0 0.0
        %1038 = vmatpush1.msra.mxu0 0.0
        %1039 = vmatprep.subr.mxu0 0.0
        %1040 = vmatpush1.msra.mxu0 0.0
        %1041 = vmatprep.subr.mxu0 0.0
        %1042 = vmatpush1.msra.mxu0 0.0
        %1043 = vmatprep.subr.mxu0 0.0
        %1044 = vmatpush1.msra.mxu0 0.0
        %1045 = vmatprep.subr.mxu0 0.0
        %1046 = vmatpush1.msra.mxu0 0.0
        %1047 = vmatprep.subr.mxu0 0.0
        %1048 = vmatpush1.msra.mxu0 0.0
        %1049 = vmatprep.subr.mxu0 0.0
        %1050 = vmatpush1.msra.mxu0 0.0
        %1051 = vmatprep.subr.mxu0 0.0
        %1052 = vmatpush1.msra.mxu0 0.0
        %1053 = vmatprep.subr.mxu0 0.0
        %1054 = vmatpush1.msra.mxu0 0.0
        %1055 = vmatprep.subr.mxu0 0.0
        %1056 = vmatpush1.msra.mxu0 0.0
        %1057 = vmatprep.subr.mxu0 0.0
        %1058 = vmatpush1.msra.mxu0 0.0
        %1059 = vmatprep.subr.mxu0 0.0
        %1060 = vmatpush1.msra.mxu0 0.0
        %1061 = vmatprep.subr.mxu0 0.0
        %1062 = vmatpush1.msra.mxu0 0.0
        %1063 = vmatprep.subr.mxu0 0.0
        %1064 = vmatpush1.msra.mxu0 0.0
        %1065 = vmatprep.subr.mxu0 0.0
        %1066 = vmatpush1.msra.mxu0 0.0
        %1067 = vmatprep.subr.mxu0 0.0
        %1068 = vmatpush1.msra.mxu0 0.0
        %1069 = vmatprep.subr.mxu0 0.0
        %1070 = vmatpush1.msra.mxu0 0.0
        %1071 = vmatprep.subr.mxu0 0.0
        %1072 = vmatpush1.msra.mxu0 0.0
        %1073 = vmatprep.subr.mxu0 0.0
        %1074 = vmatpush1.msra.mxu0 0.0
        %1075 = vmatprep.subr.mxu0 0.0
        %1076 = vmatpush1.msra.mxu0 0.0
        %1077 = vmatprep.subr.mxu0 0.0
        %1078 = vmatpush1.msra.mxu0 0.0
        %1079 = vmatprep.subr.mxu0 0.0
        %1080 = vmatpush1.msra.mxu0 0.0
        %1081 = vmatprep.subr.mxu0 0.0
        %1082 = vmatpush1.msra.mxu0 0.0
        %1083 = vmatprep.subr.mxu0 0.0
        %1084 = vmatpush1.msra.mxu0 0.0
        %1085 = vmatprep.mubr.f32.mxu0 0.0
        %1086 = vmatmul.mubr.f32.gmra.mrb[0].mxu0 %v1019
        %v1087 = vpop.f32.mrb[0].mxu0
        %v1088 = vadd.f32 0.0, %v1087
        %v1089 = vpop.f32.mrb[0].mxu0
        %1090 = vdwg.mxu0
        %1091 = vst.msk [vmem:[#allocation2] sm:$0xff] %vm774, %v1088
        %1092 = vrot.lane.b32.xlu0 %v571, 120
        %v1093 = vpop.permute.xlu0 %1092
        %1094 = vrot.lane.b32.xlu0 %v655, 120
        %v1095 = vpop.permute.xlu0 %1094
        %1096 = vrot.lane.b32.xlu0 %v660, 120
        %v1097 = vpop.permute.xlu0 %1096
        %1098 = vrot.lane.b32.xlu0 %v665, 120
        %v1099 = vpop.permute.xlu0 %1098
        %1100 = vrot.lane.b32.xlu0 %v670, 120
        %v1101 = vpop.permute.xlu0 %1100
        %v1102 = vsel %vm774, %v1093, 0
        %v1104 = vsel %vm774, %v1095, 0
        %v1106 = vsel %vm774, %v1097, 0
        %v1108 = vsel %vm774, %v1099, 0
        %v1110 = vsel %vm774, %v1101, 0
        %1112 = vmatprep.subr.mxu0 0.0
        %1113 = vmatpush1.xpose.msra.mxu0 %v1104
        %1114 = vmatprep.subr.mxu0 0.0
        %1115 = vmatpush1.xpose.msra.mxu0 %v1106
        %1116 = vmatprep.subr.mxu0 0.0
        %1117 = vmatpush1.xpose.msra.mxu0 %v1108
        %1118 = vmatprep.subr.mxu0 0.0
        %1119 = vmatpush1.xpose.msra.mxu0 %v1110
        %1120 = vmatprep.subr.mxu0 0.0
        %1121 = vmatpush1.xpose.msra.mxu0 0.0
        %1122 = vmatprep.subr.mxu0 0.0
        %1123 = vmatpush1.xpose.msra.mxu0 0.0
        %1124 = vmatprep.subr.mxu0 0.0
        %1125 = vmatpush1.xpose.msra.mxu0 0.0
        %1126 = vmatprep.subr.mxu0 0.0
        %1127 = vmatpush1.xpose.msra.mxu0 0.0
        %1128 = vmatprep.subr.mxu0 0.0
        %1129 = vmatpush1.xpose.msra.mxu0 0.0
        %1130 = vmatprep.subr.mxu0 0.0
        %1131 = vmatpush1.xpose.msra.mxu0 0.0
        %1132 = vmatprep.subr.mxu0 0.0
        %1133 = vmatpush1.xpose.msra.mxu0 0.0
        %1134 = vmatprep.subr.mxu0 0.0
        %1135 = vmatpush1.xpose.msra.mxu0 0.0
        %1136 = vmatprep.subr.mxu0 0.0
        %1137 = vmatpush1.xpose.msra.mxu0 0.0
        %1138 = vmatprep.subr.mxu0 0.0
        %1139 = vmatpush1.xpose.msra.mxu0 0.0
        %1140 = vmatprep.subr.mxu0 0.0
        %1141 = vmatpush1.xpose.msra.mxu0 0.0
        %1142 = vmatprep.subr.mxu0 0.0
        %1143 = vmatpush1.xpose.msra.mxu0 0.0
        %1144 = vmatprep.subr.mxu0 0.0
        %1145 = vmatpush1.xpose.msra.mxu0 0.0
        %1146 = vmatprep.subr.mxu0 0.0
        %1147 = vmatpush1.xpose.msra.mxu0 0.0
        %1148 = vmatprep.subr.mxu0 0.0
        %1149 = vmatpush1.xpose.msra.mxu0 0.0
        %1150 = vmatprep.subr.mxu0 0.0
        %1151 = vmatpush1.xpose.msra.mxu0 0.0
        %1152 = vmatprep.subr.mxu0 0.0
        %1153 = vmatpush1.xpose.msra.mxu0 0.0
        %1154 = vmatprep.subr.mxu0 0.0
        %1155 = vmatpush1.xpose.msra.mxu0 0.0
        %1156 = vmatprep.subr.mxu0 0.0
        %1157 = vmatpush1.xpose.msra.mxu0 0.0
        %1158 = vmatprep.subr.mxu0 0.0
        %1159 = vmatpush1.xpose.msra.mxu0 0.0
        %1160 = vmatprep.subr.mxu0 0.0
        %1161 = vmatpush1.xpose.msra.mxu0 0.0
        %1162 = vmatprep.subr.mxu0 0.0
        %1163 = vmatpush1.xpose.msra.mxu0 0.0
        %1164 = vmatprep.subr.mxu0 0.0
        %1165 = vmatpush1.xpose.msra.mxu0 0.0
        %1166 = vmatprep.subr.mxu0 0.0
        %1167 = vmatpush1.xpose.msra.mxu0 0.0
        %1168 = vmatprep.subr.mxu0 0.0
        %1169 = vmatpush1.xpose.msra.mxu0 0.0
        %1170 = vmatprep.subr.mxu0 0.0
        %1171 = vmatpush1.xpose.msra.mxu0 0.0
        %1172 = vmatprep.subr.mxu0 0.0
        %1173 = vmatpush1.xpose.msra.mxu0 0.0
        %1174 = vmatprep.subr.mxu0 0.0
        %1175 = vmatpush1.xpose.msra.mxu0 0.0
        %1176 = vmatprep.mubr.f32.mxu0 0.0
        %1177 = vmatmul.mubr.f32.gmra.mrb[0].mxu0 %v1102
        %v1178 = vpop.f32.mrb[0].mxu0
        %v1179 = vadd.f32 0.0, %v1178
        %v1180 = vpop.f32.mrb[0].mxu0
        %1181 = vdwg.mxu0
        %1183 = vrot.lane.b32.xlu0 %v1179, 127
        %v1184 = vpop.permute.xlu0 %1183
        %1186 = vrot.lane.b32.xlu0 %v1179, 31
        %v1187 = vpop.permute.xlu0 %1186
        %v1189 = vsel %vm869, %v1184, %v1187
        %v1190 = vsel %vm874, %v1189, %v1179
        %1192 = vrot.lane.b32.xlu0 %v1190, 126
        %v1193 = vpop.permute.xlu0 %1192
        %1195 = vrot.lane.b32.xlu0 %v1190, 30
        %v1196 = vpop.permute.xlu0 %1195
        %v1198 = vsel %vm883, %v1193, %v1196
        %v1199 = vsel %vm888, %v1198, %v1190
        %1201 = vrot.lane.b32.xlu0 %v1199, 124
        %v1202 = vpop.permute.xlu0 %1201
        %1204 = vrot.lane.b32.xlu0 %v1199, 28
        %v1205 = vpop.permute.xlu0 %1204
        %v1207 = vsel %vm897, %v1202, %v1205
        %v1208 = vsel %vm902, %v1207, %v1199
        %1209 = vmatprep.subr.mxu0 0.0
        %1210 = vmatpush1.msra.mxu0 %v492
        %1211 = vmatprep.subr.mxu0 0.0
        %1212 = vmatpush1.msra.mxu0 0.0
        %1213 = vmatprep.subr.mxu0 0.0
        %1214 = vmatpush1.msra.mxu0 0.0
        %1215 = vmatprep.subr.mxu0 0.0
        %1216 = vmatpush1.msra.mxu0 0.0
        %1217 = vmatprep.subr.mxu0 0.0
        %1218 = vmatpush1.msra.mxu0 0.0
        %1219 = vmatprep.subr.mxu0 0.0
        %1220 = vmatpush1.msra.mxu0 0.0
        %1221 = vmatprep.subr.mxu0 0.0
        %1222 = vmatpush1.msra.mxu0 0.0
        %1223 = vmatprep.subr.mxu0 0.0
        %1224 = vmatpush1.msra.mxu0 0.0
        %1225 = vmatprep.subr.mxu0 0.0
        %1226 = vmatpush1.msra.mxu0 0.0
        %1227 = vmatprep.subr.mxu0 0.0
        %1228 = vmatpush1.msra.mxu0 0.0
        %1229 = vmatprep.subr.mxu0 0.0
        %1230 = vmatpush1.msra.mxu0 0.0
        %1231 = vmatprep.subr.mxu0 0.0
        %1232 = vmatpush1.msra.mxu0 0.0
        %1233 = vmatprep.subr.mxu0 0.0
        %1234 = vmatpush1.msra.mxu0 0.0
        %1235 = vmatprep.subr.mxu0 0.0
        %1236 = vmatpush1.msra.mxu0 0.0
        %1237 = vmatprep.subr.mxu0 0.0
        %1238 = vmatpush1.msra.mxu0 0.0
        %1239 = vmatprep.subr.mxu0 0.0
        %1240 = vmatpush1.msra.mxu0 0.0
        %1241 = vmatprep.subr.mxu0 0.0
        %1242 = vmatpush1.msra.mxu0 0.0
        %1243 = vmatprep.subr.mxu0 0.0
        %1244 = vmatpush1.msra.mxu0 0.0
        %1245 = vmatprep.subr.mxu0 0.0
        %1246 = vmatpush1.msra.mxu0 0.0
        %1247 = vmatprep.subr.mxu0 0.0
        %1248 = vmatpush1.msra.mxu0 0.0
        %1249 = vmatprep.subr.mxu0 0.0
        %1250 = vmatpush1.msra.mxu0 0.0
        %1251 = vmatprep.subr.mxu0 0.0
        %1252 = vmatpush1.msra.mxu0 0.0
        %1253 = vmatprep.subr.mxu0 0.0
        %1254 = vmatpush1.msra.mxu0 0.0
        %1255 = vmatprep.subr.mxu0 0.0
        %1256 = vmatpush1.msra.mxu0 0.0
        %1257 = vmatprep.subr.mxu0 0.0
        %1258 = vmatpush1.msra.mxu0 0.0
        %1259 = vmatprep.subr.mxu0 0.0
        %1260 = vmatpush1.msra.mxu0 0.0
        %1261 = vmatprep.subr.mxu0 0.0
        %1262 = vmatpush1.msra.mxu0 0.0
        %1263 = vmatprep.subr.mxu0 0.0
        %1264 = vmatpush1.msra.mxu0 0.0
        %1265 = vmatprep.subr.mxu0 0.0
        %1266 = vmatpush1.msra.mxu0 0.0
        %1267 = vmatprep.subr.mxu0 0.0
        %1268 = vmatpush1.msra.mxu0 0.0
        %1269 = vmatprep.subr.mxu0 0.0
        %1270 = vmatpush1.msra.mxu0 0.0
        %1271 = vmatprep.subr.mxu0 0.0
        %1272 = vmatpush1.msra.mxu0 0.0
        %1273 = vmatprep.mubr.f32.mxu0 0.0
        %1274 = vmatmul.mubr.f32.gmra.mrb[0].mxu0 %v1102
        %v1275 = vpop.f32.mrb[0].mxu0
        %v1276 = vadd.f32 0.0, %v1275
        %v1277 = vpop.f32.mrb[0].mxu0
        %1278 = vdwg.mxu0
        %v1279 = vadd.f32 %v1208, %v1276
        %v1280 = vsel %vm975, %v1279, -inf
        %1281 = vmax.xlane.f32.xlu0 %v1280
        %v1282 = vpop.xlane.xlu0 %1281
        %v1283 = vsub.f32 %v1279, %v1282
        %v1284 = vmul.f32 %v1283, 1.442695
        %v1285 = vpow.pop %v1284
        %v1286 = vsel %vm975, %v1285, 0.0
        %1287 = vadd.xlane.f32.xlu0 %v1286
        %v1288 = vpop.xlane.xlu0 %1287
        %v1289 = vrcp.pop %v1288
        %v1290 = vmul.f32 %v1285, %v1289
        %v1291 = vsel %vm975, %v1290, 0.0
        %1293 = vrot.lane.b32.xlu0 %v1291, 97
        %v1294 = vpop.permute.xlu0 %1293
        %1296 = vrot.lane.b32.xlu0 %v1291, 1
        %v1297 = vpop.permute.xlu0 %1296
        %v1299 = vsel %vm995, %v1294, %v1297
        %v1300 = vsel %vm874, %v1299, %v1291
        %1302 = vrot.lane.b32.xlu0 %v1300, 98
        %v1303 = vpop.permute.xlu0 %1302
        %1305 = vrot.lane.b32.xlu0 %v1300, 2
        %v1306 = vpop.permute.xlu0 %1305
        %v1308 = vsel %vm1005, %v1303, %v1306
        %v1309 = vsel %vm888, %v1308, %v1300
        %1311 = vrot.lane.b32.xlu0 %v1309, 100
        %v1312 = vpop.permute.xlu0 %1311
        %1314 = vrot.lane.b32.xlu0 %v1309, 4
        %v1315 = vpop.permute.xlu0 %1314
        %v1317 = vsel %vm1015, %v1312, %v1315
        %v1318 = vsel %vm902, %v1317, %v1309
        %1323 = vrot.lane.b32.xlu0 %v756, 120
        %v1324 = vpop.permute.xlu0 %1323
        %1325 = vrot.lane.b32.xlu0 %v761, 120
        %v1326 = vpop.permute.xlu0 %1325
        %1327 = vrot.lane.b32.xlu0 %v766, 120
        %v1328 = vpop.permute.xlu0 %1327
        %1329 = vrot.lane.b32.xlu0 %v771, 120
        %v1330 = vpop.permute.xlu0 %1329
        %v1336 = vsel %vm497, %v1318, 0
        %1338 = vmatprep.subr.mxu0 0.0
        %1339 = vmatpush1.msra.mxu0 %v1324
        %1340 = vmatprep.subr.mxu0 0.0
        %1341 = vmatpush1.msra.mxu0 %v1326
        %1342 = vmatprep.subr.mxu0 0.0
        %1343 = vmatpush1.msra.mxu0 %v1328
        %1344 = vmatprep.subr.mxu0 0.0
        %1345 = vmatpush1.msra.mxu0 %v1330
        %1346 = vmatprep.subr.mxu0 0.0
        %1347 = vmatpush1.msra.mxu0 0.0
        %1348 = vmatprep.subr.mxu0 0.0
        %1349 = vmatpush1.msra.mxu0 0.0
        %1350 = vmatprep.subr.mxu0 0.0
        %1351 = vmatpush1.msra.mxu0 0.0
        %1352 = vmatprep.subr.mxu0 0.0
        %1353 = vmatpush1.msra.mxu0 0.0
        %1354 = vmatprep.subr.mxu0 0.0
        %1355 = vmatpush1.msra.mxu0 0.0
        %1356 = vmatprep.subr.mxu0 0.0
        %1357 = vmatpush1.msra.mxu0 0.0
        %1358 = vmatprep.subr.mxu0 0.0
        %1359 = vmatpush1.msra.mxu0 0.0
        %1360 = vmatprep.subr.mxu0 0.0
        %1361 = vmatpush1.msra.mxu0 0.0
        %1362 = vmatprep.subr.mxu0 0.0
        %1363 = vmatpush1.msra.mxu0 0.0
        %1364 = vmatprep.subr.mxu0 0.0
        %1365 = vmatpush1.msra.mxu0 0.0
        %1366 = vmatprep.subr.mxu0 0.0
        %1367 = vmatpush1.msra.mxu0 0.0
        %1368 = vmatprep.subr.mxu0 0.0
        %1369 = vmatpush1.msra.mxu0 0.0
        %1370 = vmatprep.subr.mxu0 0.0
        %1371 = vmatpush1.msra.mxu0 0.0
        %1372 = vmatprep.subr.mxu0 0.0
        %1373 = vmatpush1.msra.mxu0 0.0
        %1374 = vmatprep.subr.mxu0 0.0
        %1375 = vmatpush1.msra.mxu0 0.0
        %1376 = vmatprep.subr.mxu0 0.0
        %1377 = vmatpush1.msra.mxu0 0.0
        %1378 = vmatprep.subr.mxu0 0.0
        %1379 = vmatpush1.msra.mxu0 0.0
        %1380 = vmatprep.subr.mxu0 0.0
        %1381 = vmatpush1.msra.mxu0 0.0
        %1382 = vmatprep.subr.mxu0 0.0
        %1383 = vmatpush1.msra.mxu0 0.0
        %1384 = vmatprep.subr.mxu0 0.0
        %1385 = vmatpush1.msra.mxu0 0.0
        %1386 = vmatprep.subr.mxu0 0.0
        %1387 = vmatpush1.msra.mxu0 0.0
        %1388 = vmatprep.subr.mxu0 0.0
        %1389 = vmatpush1.msra.mxu0 0.0
        %1390 = vmatprep.subr.mxu0 0.0
        %1391 = vmatpush1.msra.mxu0 0.0
        %1392 = vmatprep.subr.mxu0 0.0
        %1393 = vmatpush1.msra.mxu0 0.0
        %1394 = vmatprep.subr.mxu0 0.0
        %1395 = vmatpush1.msra.mxu0 0.0
        %1396 = vmatprep.subr.mxu0 0.0
        %1397 = vmatpush1.msra.mxu0 0.0
        %1398 = vmatprep.subr.mxu0 0.0
        %1399 = vmatpush1.msra.mxu0 0.0
        %1400 = vmatprep.subr.mxu0 0.0
        %1401 = vmatpush1.msra.mxu0 0.0
        %1402 = vmatprep.mubr.f32.mxu0 0.0
        %1403 = vmatmul.mubr.f32.gmra.mrb[0].mxu0 %v1336
        %v1404 = vpop.f32.mrb[0].mxu0
        %v1405 = vadd.f32 0.0, %v1404
        %v1406 = vpop.f32.mrb[0].mxu0
        %1407 = vdwg.mxu0
        %1409 = vrot.lane.b32.xlu0 %v1405, 8
        %v1410 = vpop.permute.xlu0 %1409
        %vm1412 = vcmask 130112
        %1413 = vst.msk [vmem:[#allocation2] sm:$0xff] %vm1412, %v1410
        %1414 = vrot.lane.b32.xlu0 %v571, 112
        %v1415 = vpop.permute.xlu0 %1414
        %1416 = vrot.lane.b32.xlu0 %v655, 112
        %v1417 = vpop.permute.xlu0 %1416
        %1418 = vrot.lane.b32.xlu0 %v660, 112
        %v1419 = vpop.permute.xlu0 %1418
        %1420 = vrot.lane.b32.xlu0 %v665, 112
        %v1421 = vpop.permute.xlu0 %1420
        %1422 = vrot.lane.b32.xlu0 %v670, 112
        %v1423 = vpop.permute.xlu0 %1422
        %v1424 = vsel %vm774, %v1415, 0
        %v1426 = vsel %vm774, %v1417, 0
        %v1428 = vsel %vm774, %v1419, 0
        %v1430 = vsel %vm774, %v1421, 0
        %v1432 = vsel %vm774, %v1423, 0
        %1434 = vmatprep.subr.mxu0 0.0
        %1435 = vmatpush1.xpose.msra.mxu0 %v1426
        %1436 = vmatprep.subr.mxu0 0.0
        %1437 = vmatpush1.xpose.msra.mxu0 %v1428
        %1438 = vmatprep.subr.mxu0 0.0
        %1439 = vmatpush1.xpose.msra.mxu0 %v1430
        %1440 = vmatprep.subr.mxu0 0.0
        %1441 = vmatpush1.xpose.msra.mxu0 %v1432
        %1442 = vmatprep.subr.mxu0 0.0
        %1443 = vmatpush1.xpose.msra.mxu0 0.0
        %1444 = vmatprep.subr.mxu0 0.0
        %1445 = vmatpush1.xpose.msra.mxu0 0.0
        %1446 = vmatprep.subr.mxu0 0.0
        %1447 = vmatpush1.xpose.msra.mxu0 0.0
        %1448 = vmatprep.subr.mxu0 0.0
        %1449 = vmatpush1.xpose.msra.mxu0 0.0
        %1450 = vmatprep.subr.mxu0 0.0
        %1451 = vmatpush1.xpose.msra.mxu0 0.0
        %1452 = vmatprep.subr.mxu0 0.0
        %1453 = vmatpush1.xpose.msra.mxu0 0.0
        %1454 = vmatprep.subr.mxu0 0.0
        %1455 = vmatpush1.xpose.msra.mxu0 0.0
        %1456 = vmatprep.subr.mxu0 0.0
        %1457 = vmatpush1.xpose.msra.mxu0 0.0
        %1458 = vmatprep.subr.mxu0 0.0
        %1459 = vmatpush1.xpose.msra.mxu0 0.0
        %1460 = vmatprep.subr.mxu0 0.0
        %1461 = vmatpush1.xpose.msra.mxu0 0.0
        %1462 = vmatprep.subr.mxu0 0.0
        %1463 = vmatpush1.xpose.msra.mxu0 0.0
        %1464 = vmatprep.subr.mxu0 0.0
        %1465 = vmatpush1.xpose.msra.mxu0 0.0
        %1466 = vmatprep.subr.mxu0 0.0
        %1467 = vmatpush1.xpose.msra.mxu0 0.0
        %1468 = vmatprep.subr.mxu0 0.0
        %1469 = vmatpush1.xpose.msra.mxu0 0.0
        %1470 = vmatprep.subr.mxu0 0.0
        %1471 = vmatpush1.xpose.msra.mxu0 0.0
        %1472 = vmatprep.subr.mxu0 0.0
        %1473 = vmatpush1.xpose.msra.mxu0 0.0
        %1474 = vmatprep.subr.mxu0 0.0
        %1475 = vmatpush1.xpose.msra.mxu0 0.0
        %1476 = vmatprep.subr.mxu0 0.0
        %1477 = vmatpush1.xpose.msra.mxu0 0.0
        %1478 = vmatprep.subr.mxu0 0.0
        %1479 = vmatpush1.xpose.msra.mxu0 0.0
        %1480 = vmatprep.subr.mxu0 0.0
        %1481 = vmatpush1.xpose.msra.mxu0 0.0
        %1482 = vmatprep.subr.mxu0 0.0
        %1483 = vmatpush1.xpose.msra.mxu0 0.0
        %1484 = vmatprep.subr.mxu0 0.0
        %1485 = vmatpush1.xpose.msra.mxu0 0.0
        %1486 = vmatprep.subr.mxu0 0.0
        %1487 = vmatpush1.xpose.msra.mxu0 0.0
        %1488 = vmatprep.subr.mxu0 0.0
        %1489 = vmatpush1.xpose.msra.mxu0 0.0
        %1490 = vmatprep.subr.mxu0 0.0
        %1491 = vmatpush1.xpose.msra.mxu0 0.0
        %1492 = vmatprep.subr.mxu0 0.0
        %1493 = vmatpush1.xpose.msra.mxu0 0.0
        %1494 = vmatprep.subr.mxu0 0.0
        %1495 = vmatpush1.xpose.msra.mxu0 0.0
        %1496 = vmatprep.subr.mxu0 0.0
        %1497 = vmatpush1.xpose.msra.mxu0 0.0
        %1498 = vmatprep.mubr.f32.mxu0 0.0
        %1499 = vmatmul.mubr.f32.gmra.mrb[0].mxu0 %v1424
        %v1500 = vpop.f32.mrb[0].mxu0
        %v1501 = vadd.f32 0.0, %v1500
        %v1502 = vpop.f32.mrb[0].mxu0
        %1503 = vdwg.mxu0
        %1505 = vrot.lane.b32.xlu0 %v1501, 127
        %v1506 = vpop.permute.xlu0 %1505
        %1508 = vrot.lane.b32.xlu0 %v1501, 31
        %v1509 = vpop.permute.xlu0 %1508
        %v1511 = vsel %vm869, %v1506, %v1509
        %v1512 = vsel %vm874, %v1511, %v1501
        %1514 = vrot.lane.b32.xlu0 %v1512, 126
        %v1515 = vpop.permute.xlu0 %1514
        %1517 = vrot.lane.b32.xlu0 %v1512, 30
        %v1518 = vpop.permute.xlu0 %1517
        %v1520 = vsel %vm883, %v1515, %v1518
        %v1521 = vsel %vm888, %v1520, %v1512
        %1523 = vrot.lane.b32.xlu0 %v1521, 124
        %v1524 = vpop.permute.xlu0 %1523
        %1526 = vrot.lane.b32.xlu0 %v1521, 28
        %v1527 = vpop.permute.xlu0 %1526
        %v1529 = vsel %vm897, %v1524, %v1527
        %v1530 = vsel %vm902, %v1529, %v1521
        %1531 = vmatprep.subr.mxu0 0.0
        %1532 = vmatpush1.msra.mxu0 %v492
        %1533 = vmatprep.subr.mxu0 0.0
        %1534 = vmatpush1.msra.mxu0 0.0
        %1535 = vmatprep.subr.mxu0 0.0
        %1536 = vmatpush1.msra.mxu0 0.0
        %1537 = vmatprep.subr.mxu0 0.0
        %1538 = vmatpush1.msra.mxu0 0.0
        %1539 = vmatprep.subr.mxu0 0.0
        %1540 = vmatpush1.msra.mxu0 0.0
        %1541 = vmatprep.subr.mxu0 0.0
        %1542 = vmatpush1.msra.mxu0 0.0
        %1543 = vmatprep.subr.mxu0 0.0
        %1544 = vmatpush1.msra.mxu0 0.0
        %1545 = vmatprep.subr.mxu0 0.0
        %1546 = vmatpush1.msra.mxu0 0.0
        %1547 = vmatprep.subr.mxu0 0.0
        %1548 = vmatpush1.msra.mxu0 0.0
        %1549 = vmatprep.subr.mxu0 0.0
        %1550 = vmatpush1.msra.mxu0 0.0
        %1551 = vmatprep.subr.mxu0 0.0
        %1552 = vmatpush1.msra.mxu0 0.0
        %1553 = vmatprep.subr.mxu0 0.0
        %1554 = vmatpush1.msra.mxu0 0.0
        %1555 = vmatprep.subr.mxu0 0.0
        %1556 = vmatpush1.msra.mxu0 0.0
        %1557 = vmatprep.subr.mxu0 0.0
        %1558 = vmatpush1.msra.mxu0 0.0
        %1559 = vmatprep.subr.mxu0 0.0
        %1560 = vmatpush1.msra.mxu0 0.0
        %1561 = vmatprep.subr.mxu0 0.0
        %1562 = vmatpush1.msra.mxu0 0.0
        %1563 = vmatprep.subr.mxu0 0.0
        %1564 = vmatpush1.msra.mxu0 0.0
        %1565 = vmatprep.subr.mxu0 0.0
        %1566 = vmatpush1.msra.mxu0 0.0
        %1567 = vmatprep.subr.mxu0 0.0
        %1568 = vmatpush1.msra.mxu0 0.0
        %1569 = vmatprep.subr.mxu0 0.0
        %1570 = vmatpush1.msra.mxu0 0.0
        %1571 = vmatprep.subr.mxu0 0.0
        %1572 = vmatpush1.msra.mxu0 0.0
        %1573 = vmatprep.subr.mxu0 0.0
        %1574 = vmatpush1.msra.mxu0 0.0
        %1575 = vmatprep.subr.mxu0 0.0
        %1576 = vmatpush1.msra.mxu0 0.0
        %1577 = vmatprep.subr.mxu0 0.0
        %1578 = vmatpush1.msra.mxu0 0.0
        %1579 = vmatprep.subr.mxu0 0.0
        %1580 = vmatpush1.msra.mxu0 0.0
        %1581 = vmatprep.subr.mxu0 0.0
        %1582 = vmatpush1.msra.mxu0 0.0
        %1583 = vmatprep.subr.mxu0 0.0
        %1584 = vmatpush1.msra.mxu0 0.0
        %1585 = vmatprep.subr.mxu0 0.0
        %1586 = vmatpush1.msra.mxu0 0.0
        %1587 = vmatprep.subr.mxu0 0.0
        %1588 = vmatpush1.msra.mxu0 0.0
        %1589 = vmatprep.subr.mxu0 0.0
        %1590 = vmatpush1.msra.mxu0 0.0
        %1591 = vmatprep.subr.mxu0 0.0
        %1592 = vmatpush1.msra.mxu0 0.0
        %1593 = vmatprep.subr.mxu0 0.0
        %1594 = vmatpush1.msra.mxu0 0.0
        %1595 = vmatprep.mubr.f32.mxu0 0.0
        %1596 = vmatmul.mubr.f32.gmra.mrb[0].mxu0 %v1424
        %v1597 = vpop.f32.mrb[0].mxu0
        %v1598 = vadd.f32 0.0, %v1597
        %v1599 = vpop.f32.mrb[0].mxu0
        %1600 = vdwg.mxu0
        %v1601 = vadd.f32 %v1530, %v1598
        %v1602 = vsel %vm975, %v1601, -inf
        %1603 = vmax.xlane.f32.xlu0 %v1602
        %v1604 = vpop.xlane.xlu0 %1603
        %v1605 = vsub.f32 %v1601, %v1604
        %v1606 = vmul.f32 %v1605, 1.442695
        %v1607 = vpow.pop %v1606
        %v1608 = vsel %vm975, %v1607, 0.0
        %1609 = vadd.xlane.f32.xlu0 %v1608
        %v1610 = vpop.xlane.xlu0 %1609
        %v1611 = vrcp.pop %v1610
        %v1612 = vmul.f32 %v1607, %v1611
        %v1613 = vsel %vm975, %v1612, 0.0
        %1615 = vrot.lane.b32.xlu0 %v1613, 97
        %v1616 = vpop.permute.xlu0 %1615
        %1618 = vrot.lane.b32.xlu0 %v1613, 1
        %v1619 = vpop.permute.xlu0 %1618
        %v1621 = vsel %vm995, %v1616, %v1619
        %v1622 = vsel %vm874, %v1621, %v1613
        %1624 = vrot.lane.b32.xlu0 %v1622, 98
        %v1625 = vpop.permute.xlu0 %1624
        %1627 = vrot.lane.b32.xlu0 %v1622, 2
        %v1628 = vpop.permute.xlu0 %1627
        %v1630 = vsel %vm1005, %v1625, %v1628
        %v1631 = vsel %vm888, %v1630, %v1622
        %1633 = vrot.lane.b32.xlu0 %v1631, 100
        %v1634 = vpop.permute.xlu0 %1633
        %1636 = vrot.lane.b32.xlu0 %v1631, 4
        %v1637 = vpop.permute.xlu0 %1636
        %v1639 = vsel %vm1015, %v1634, %v1637
        %v1640 = vsel %vm902, %v1639, %v1631
        %1641 = vrot.lane.b32.xlu0 %v756, 112
        %v1642 = vpop.permute.xlu0 %1641
        %1643 = vrot.lane.b32.xlu0 %v761, 112
        %v1644 = vpop.permute.xlu0 %1643
        %1645 = vrot.lane.b32.xlu0 %v766, 112
        %v1646 = vpop.permute.xlu0 %1645
        %1647 = vrot.lane.b32.xlu0 %v771, 112
        %v1648 = vpop.permute.xlu0 %1647
        %v1654 = vsel %vm497, %v1640, 0
        %1656 = vmatprep.subr.mxu0 0.0
        %1657 = vmatpush1.msra.mxu0 %v1642
        %1658 = vmatprep.subr.mxu0 0.0
        %1659 = vmatpush1.msra.mxu0 %v1644
        %1660 = vmatprep.subr.mxu0 0.0
        %1661 = vmatpush1.msra.mxu0 %v1646
        %1662 = vmatprep.subr.mxu0 0.0
        %1663 = vmatpush1.msra.mxu0 %v1648
        %1664 = vmatprep.subr.mxu0 0.0
        %1665 = vmatpush1.msra.mxu0 0.0
        %1666 = vmatprep.subr.mxu0 0.0
        %1667 = vmatpush1.msra.mxu0 0.0
        %1668 = vmatprep.subr.mxu0 0.0
        %1669 = vmatpush1.msra.mxu0 0.0
        %1670 = vmatprep.subr.mxu0 0.0
        %1671 = vmatpush1.msra.mxu0 0.0
        %1672 = vmatprep.subr.mxu0 0.0
        %1673 = vmatpush1.msra.mxu0 0.0
        %1674 = vmatprep.subr.mxu0 0.0
        %1675 = vmatpush1.msra.mxu0 0.0
        %1676 = vmatprep.subr.mxu0 0.0
        %1677 = vmatpush1.msra.mxu0 0.0
        %1678 = vmatprep.subr.mxu0 0.0
        %1679 = vmatpush1.msra.mxu0 0.0
        %1680 = vmatprep.subr.mxu0 0.0
        %1681 = vmatpush1.msra.mxu0 0.0
        %1682 = vmatprep.subr.mxu0 0.0
        %1683 = vmatpush1.msra.mxu0 0.0
        %1684 = vmatprep.subr.mxu0 0.0
        %1685 = vmatpush1.msra.mxu0 0.0
        %1686 = vmatprep.subr.mxu0 0.0
        %1687 = vmatpush1.msra.mxu0 0.0
        %1688 = vmatprep.subr.mxu0 0.0
        %1689 = vmatpush1.msra.mxu0 0.0
        %1690 = vmatprep.subr.mxu0 0.0
        %1691 = vmatpush1.msra.mxu0 0.0
        %1692 = vmatprep.subr.mxu0 0.0
        %1693 = vmatpush1.msra.mxu0 0.0
        %1694 = vmatprep.subr.mxu0 0.0
        %1695 = vmatpush1.msra.mxu0 0.0
        %1696 = vmatprep.subr.mxu0 0.0
        %1697 = vmatpush1.msra.mxu0 0.0
        %1698 = vmatprep.subr.mxu0 0.0
        %1699 = vmatpush1.msra.mxu0 0.0
        %1700 = vmatprep.subr.mxu0 0.0
        %1701 = vmatpush1.msra.mxu0 0.0
        %1702 = vmatprep.subr.mxu0 0.0
        %1703 = vmatpush1.msra.mxu0 0.0
        %1704 = vmatprep.subr.mxu0 0.0
        %1705 = vmatpush1.msra.mxu0 0.0
        %1706 = vmatprep.subr.mxu0 0.0
        %1707 = vmatpush1.msra.mxu0 0.0
        %1708 = vmatprep.subr.mxu0 0.0
        %1709 = vmatpush1.msra.mxu0 0.0
        %1710 = vmatprep.subr.mxu0 0.0
        %1711 = vmatpush1.msra.mxu0 0.0
        %1712 = vmatprep.subr.mxu0 0.0
        %1713 = vmatpush1.msra.mxu0 0.0
        %1714 = vmatprep.subr.mxu0 0.0
        %1715 = vmatpush1.msra.mxu0 0.0
        %1716 = vmatprep.subr.mxu0 0.0
        %1717 = vmatpush1.msra.mxu0 0.0
        %1718 = vmatprep.subr.mxu0 0.0
        %1719 = vmatpush1.msra.mxu0 0.0
        %1720 = vmatprep.mubr.f32.mxu0 0.0
        %1721 = vmatmul.mubr.f32.gmra.mrb[0].mxu0 %v1654
        %v1722 = vpop.f32.mrb[0].mxu0
        %v1723 = vadd.f32 0.0, %v1722
        %v1724 = vpop.f32.mrb[0].mxu0
        %1725 = vdwg.mxu0
        %1727 = vrot.lane.b32.xlu0 %v1723, 16
        %v1728 = vpop.permute.xlu0 %1727
        %vm1730 = vcmask 195712
        %1731 = vst.msk [vmem:[#allocation2] sm:$0xff] %vm1730, %v1728
        %1732 = vrot.lane.b32.xlu0 %v571, 104
        %v1733 = vpop.permute.xlu0 %1732
        %1734 = vrot.lane.b32.xlu0 %v655, 104
        %v1735 = vpop.permute.xlu0 %1734
        %1736 = vrot.lane.b32.xlu0 %v660, 104
        %v1737 = vpop.permute.xlu0 %1736
        %1738 = vrot.lane.b32.xlu0 %v665, 104
        %v1739 = vpop.permute.xlu0 %1738
        %1740 = vrot.lane.b32.xlu0 %v670, 104
        %v1741 = vpop.permute.xlu0 %1740
        %v1742 = vsel %vm774, %v1733, 0
        %v1744 = vsel %vm774, %v1735, 0
        %v1746 = vsel %vm774, %v1737, 0
        %v1748 = vsel %vm774, %v1739, 0
        %v1750 = vsel %vm774, %v1741, 0
        %1752 = vmatprep.subr.mxu0 0.0
        %1753 = vmatpush1.xpose.msra.mxu0 %v1744
        %1754 = vmatprep.subr.mxu0 0.0
        %1755 = vmatpush1.xpose.msra.mxu0 %v1746
        %1756 = vmatprep.subr.mxu0 0.0
        %1757 = vmatpush1.xpose.msra.mxu0 %v1748
        %1758 = vmatprep.subr.mxu0 0.0
        %1759 = vmatpush1.xpose.msra.mxu0 %v1750
        %1760 = vmatprep.subr.mxu0 0.0
        %1761 = vmatpush1.xpose.msra.mxu0 0.0
        %1762 = vmatprep.subr.mxu0 0.0
        %1763 = vmatpush1.xpose.msra.mxu0 0.0
        %1764 = vmatprep.subr.mxu0 0.0
        %1765 = vmatpush1.xpose.msra.mxu0 0.0
        %1766 = vmatprep.subr.mxu0 0.0
        %1767 = vmatpush1.xpose.msra.mxu0 0.0
        %1768 = vmatprep.subr.mxu0 0.0
        %1769 = vmatpush1.xpose.msra.mxu0 0.0
        %1770 = vmatprep.subr.mxu0 0.0
        %1771 = vmatpush1.xpose.msra.mxu0 0.0
        %1772 = vmatprep.subr.mxu0 0.0
        %1773 = vmatpush1.xpose.msra.mxu0 0.0
        %1774 = vmatprep.subr.mxu0 0.0
        %1775 = vmatpush1.xpose.msra.mxu0 0.0
        %1776 = vmatprep.subr.mxu0 0.0
        %1777 = vmatpush1.xpose.msra.mxu0 0.0
        %1778 = vmatprep.subr.mxu0 0.0
        %1779 = vmatpush1.xpose.msra.mxu0 0.0
        %1780 = vmatprep.subr.mxu0 0.0
        %1781 = vmatpush1.xpose.msra.mxu0 0.0
        %1782 = vmatprep.subr.mxu0 0.0
        %1783 = vmatpush1.xpose.msra.mxu0 0.0
        %1784 = vmatprep.subr.mxu0 0.0
        %1785 = vmatpush1.xpose.msra.mxu0 0.0
        %1786 = vmatprep.subr.mxu0 0.0
        %1787 = vmatpush1.xpose.msra.mxu0 0.0
        %1788 = vmatprep.subr.mxu0 0.0
        %1789 = vmatpush1.xpose.msra.mxu0 0.0
        %1790 = vmatprep.subr.mxu0 0.0
        %1791 = vmatpush1.xpose.msra.mxu0 0.0
        %1792 = vmatprep.subr.mxu0 0.0
        %1793 = vmatpush1.xpose.msra.mxu0 0.0
        %1794 = vmatprep.subr.mxu0 0.0
        %1795 = vmatpush1.xpose.msra.mxu0 0.0
        %1796 = vmatprep.subr.mxu0 0.0
        %1797 = vmatpush1.xpose.msra.mxu0 0.0
        %1798 = vmatprep.subr.mxu0 0.0
        %1799 = vmatpush1.xpose.msra.mxu0 0.0
        %1800 = vmatprep.subr.mxu0 0.0
        %1801 = vmatpush1.xpose.msra.mxu0 0.0
        %1802 = vmatprep.subr.mxu0 0.0
        %1803 = vmatpush1.xpose.msra.mxu0 0.0
        %1804 = vmatprep.subr.mxu0 0.0
        %1805 = vmatpush1.xpose.msra.mxu0 0.0
        %1806 = vmatprep.subr.mxu0 0.0
        %1807 = vmatpush1.xpose.msra.mxu0 0.0
        %1808 = vmatprep.subr.mxu0 0.0
        %1809 = vmatpush1.xpose.msra.mxu0 0.0
        %1810 = vmatprep.subr.mxu0 0.0
        %1811 = vmatpush1.xpose.msra.mxu0 0.0
        %1812 = vmatprep.subr.mxu0 0.0
        %1813 = vmatpush1.xpose.msra.mxu0 0.0
        %1814 = vmatprep.subr.mxu0 0.0
        %1815 = vmatpush1.xpose.msra.mxu0 0.0
        %1816 = vmatprep.mubr.f32.mxu0 0.0
        %1817 = vmatmul.mubr.f32.gmra.mrb[0].mxu0 %v1742
        %v1818 = vpop.f32.mrb[0].mxu0
        %v1819 = vadd.f32 0.0, %v1818
        %v1820 = vpop.f32.mrb[0].mxu0
        %1821 = vdwg.mxu0
        %1823 = vrot.lane.b32.xlu0 %v1819, 127
        %v1824 = vpop.permute.xlu0 %1823
        %1826 = vrot.lane.b32.xlu0 %v1819, 31
        %v1827 = vpop.permute.xlu0 %1826
        %v1829 = vsel %vm869, %v1824, %v1827
        %v1830 = vsel %vm874, %v1829, %v1819
        %1832 = vrot.lane.b32.xlu0 %v1830, 126
        %v1833 = vpop.permute.xlu0 %1832
        %1835 = vrot.lane.b32.xlu0 %v1830, 30
        %v1836 = vpop.permute.xlu0 %1835
        %v1838 = vsel %vm883, %v1833, %v1836
        %v1839 = vsel %vm888, %v1838, %v1830
        %1841 = vrot.lane.b32.xlu0 %v1839, 124
        %v1842 = vpop.permute.xlu0 %1841
        %1844 = vrot.lane.b32.xlu0 %v1839, 28
        %v1845 = vpop.permute.xlu0 %1844
        %v1847 = vsel %vm897, %v1842, %v1845
        %v1848 = vsel %vm902, %v1847, %v1839
        %1849 = vmatprep.subr.mxu0 0.0
        %1850 = vmatpush1.msra.mxu0 %v492
        %1851 = vmatprep.subr.mxu0 0.0
        %1852 = vmatpush1.msra.mxu0 0.0
        %1853 = vmatprep.subr.mxu0 0.0
        %1854 = vmatpush1.msra.mxu0 0.0
        %1855 = vmatprep.subr.mxu0 0.0
        %1856 = vmatpush1.msra.mxu0 0.0
        %1857 = vmatprep.subr.mxu0 0.0
        %1858 = vmatpush1.msra.mxu0 0.0
        %1859 = vmatprep.subr.mxu0 0.0
        %1860 = vmatpush1.msra.mxu0 0.0
        %1861 = vmatprep.subr.mxu0 0.0
        %1862 = vmatpush1.msra.mxu0 0.0
        %1863 = vmatprep.subr.mxu0 0.0
        %1864 = vmatpush1.msra.mxu0 0.0
        %1865 = vmatprep.subr.mxu0 0.0
        %1866 = vmatpush1.msra.mxu0 0.0
        %1867 = vmatprep.subr.mxu0 0.0
        %1868 = vmatpush1.msra.mxu0 0.0
        %1869 = vmatprep.subr.mxu0 0.0
        %1870 = vmatpush1.msra.mxu0 0.0
        %1871 = vmatprep.subr.mxu0 0.0
        %1872 = vmatpush1.msra.mxu0 0.0
        %1873 = vmatprep.subr.mxu0 0.0
        %1874 = vmatpush1.msra.mxu0 0.0
        %1875 = vmatprep.subr.mxu0 0.0
        %1876 = vmatpush1.msra.mxu0 0.0
        %1877 = vmatprep.subr.mxu0 0.0
        %1878 = vmatpush1.msra.mxu0 0.0
        %1879 = vmatprep.subr.mxu0 0.0
        %1880 = vmatpush1.msra.mxu0 0.0
        %1881 = vmatprep.subr.mxu0 0.0
        %1882 = vmatpush1.msra.mxu0 0.0
        %1883 = vmatprep.subr.mxu0 0.0
        %1884 = vmatpush1.msra.mxu0 0.0
        %1885 = vmatprep.subr.mxu0 0.0
        %1886 = vmatpush1.msra.mxu0 0.0
        %1887 = vmatprep.subr.mxu0 0.0
        %1888 = vmatpush1.msra.mxu0 0.0
        %1889 = vmatprep.subr.mxu0 0.0
        %1890 = vmatpush1.msra.mxu0 0.0
        %1891 = vmatprep.subr.mxu0 0.0
        %1892 = vmatpush1.msra.mxu0 0.0
        %1893 = vmatprep.subr.mxu0 0.0
        %1894 = vmatpush1.msra.mxu0 0.0
        %1895 = vmatprep.subr.mxu0 0.0
        %1896 = vmatpush1.msra.mxu0 0.0
        %1897 = vmatprep.subr.mxu0 0.0
        %1898 = vmatpush1.msra.mxu0 0.0
        %1899 = vmatprep.subr.mxu0 0.0
        %1900 = vmatpush1.msra.mxu0 0.0
        %1901 = vmatprep.subr.mxu0 0.0
        %1902 = vmatpush1.msra.mxu0 0.0
        %1903 = vmatprep.subr.mxu0 0.0
        %1904 = vmatpush1.msra.mxu0 0.0
        %1905 = vmatprep.subr.mxu0 0.0
        %1906 = vmatpush1.msra.mxu0 0.0
        %1907 = vmatprep.subr.mxu0 0.0
        %1908 = vmatpush1.msra.mxu0 0.0
        %1909 = vmatprep.subr.mxu0 0.0
        %1910 = vmatpush1.msra.mxu0 0.0
        %1911 = vmatprep.subr.mxu0 0.0
        %1912 = vmatpush1.msra.mxu0 0.0
        %1913 = vmatprep.mubr.f32.mxu0 0.0
        %1914 = vmatmul.mubr.f32.gmra.mrb[0].mxu0 %v1742
        %v1915 = vpop.f32.mrb[0].mxu0
        %v1916 = vadd.f32 0.0, %v1915
        %v1917 = vpop.f32.mrb[0].mxu0
        %1918 = vdwg.mxu0
        %v1919 = vadd.f32 %v1848, %v1916
        %v1920 = vsel %vm975, %v1919, -inf
        %1921 = vmax.xlane.f32.xlu0 %v1920
        %v1922 = vpop.xlane.xlu0 %1921
        %v1923 = vsub.f32 %v1919, %v1922
        %v1924 = vmul.f32 %v1923, 1.442695
        %v1925 = vpow.pop %v1924
        %v1926 = vsel %vm975, %v1925, 0.0
        %1927 = vadd.xlane.f32.xlu0 %v1926
        %v1928 = vpop.xlane.xlu0 %1927
        %v1929 = vrcp.pop %v1928
        %v1930 = vmul.f32 %v1925, %v1929
        %v1931 = vsel %vm975, %v1930, 0.0
        %1933 = vrot.lane.b32.xlu0 %v1931, 97
        %v1934 = vpop.permute.xlu0 %1933
        %1936 = vrot.lane.b32.xlu0 %v1931, 1
        %v1937 = vpop.permute.xlu0 %1936
        %v1939 = vsel %vm995, %v1934, %v1937
        %v1940 = vsel %vm874, %v1939, %v1931
        %1942 = vrot.lane.b32.xlu0 %v1940, 98
        %v1943 = vpop.permute.xlu0 %1942
        %1945 = vrot.lane.b32.xlu0 %v1940, 2
        %v1946 = vpop.permute.xlu0 %1945
        %v1948 = vsel %vm1005, %v1943, %v1946
        %v1949 = vsel %vm888, %v1948, %v1940
        %1951 = vrot.lane.b32.xlu0 %v1949, 100
        %v1952 = vpop.permute.xlu0 %1951
        %1954 = vrot.lane.b32.xlu0 %v1949, 4
        %v1955 = vpop.permute.xlu0 %1954
        %v1957 = vsel %vm1015, %v1952, %v1955
        %v1958 = vsel %vm902, %v1957, %v1949
        %1959 = vrot.lane.b32.xlu0 %v756, 104
        %v1960 = vpop.permute.xlu0 %1959
        %1961 = vrot.lane.b32.xlu0 %v761, 104
        %v1962 = vpop.permute.xlu0 %1961
        %1963 = vrot.lane.b32.xlu0 %v766, 104
        %v1964 = vpop.permute.xlu0 %1963
        %1965 = vrot.lane.b32.xlu0 %v771, 104
        %v1966 = vpop.permute.xlu0 %1965
        %v1972 = vsel %vm497, %v1958, 0
        %1974 = vmatprep.subr.mxu0 0.0
        %1975 = vmatpush1.msra.mxu0 %v1960
        %1976 = vmatprep.subr.mxu0 0.0
        %1977 = vmatpush1.msra.mxu0 %v1962
        %1978 = vmatprep.subr.mxu0 0.0
        %1979 = vmatpush1.msra.mxu0 %v1964
        %1980 = vmatprep.subr.mxu0 0.0
        %1981 = vmatpush1.msra.mxu0 %v1966
        %1982 = vmatprep.subr.mxu0 0.0
        %1983 = vmatpush1.msra.mxu0 0.0
        %1984 = vmatprep.subr.mxu0 0.0
        %1985 = vmatpush1.msra.mxu0 0.0
        %1986 = vmatprep.subr.mxu0 0.0
        %1987 = vmatpush1.msra.mxu0 0.0
        %1988 = vmatprep.subr.mxu0 0.0
        %1989 = vmatpush1.msra.mxu0 0.0
        %1990 = vmatprep.subr.mxu0 0.0
        %1991 = vmatpush1.msra.mxu0 0.0
        %1992 = vmatprep.subr.mxu0 0.0
        %1993 = vmatpush1.msra.mxu0 0.0
        %1994 = vmatprep.subr.mxu0 0.0
        %1995 = vmatpush1.msra.mxu0 0.0
        %1996 = vmatprep.subr.mxu0 0.0
        %1997 = vmatpush1.msra.mxu0 0.0
        %1998 = vmatprep.subr.mxu0 0.0
        %1999 = vmatpush1.msra.mxu0 0.0
        %2000 = vmatprep.subr.mxu0 0.0
        %2001 = vmatpush1.msra.mxu0 0.0
        %2002 = vmatprep.subr.mxu0 0.0
        %2003 = vmatpush1.msra.mxu0 0.0
        %2004 = vmatprep.subr.mxu0 0.0
        %2005 = vmatpush1.msra.mxu0 0.0
        %2006 = vmatprep.subr.mxu0 0.0
        %2007 = vmatpush1.msra.mxu0 0.0
        %2008 = vmatprep.subr.mxu0 0.0
        %2009 = vmatpush1.msra.mxu0 0.0
        %2010 = vmatprep.subr.mxu0 0.0
        %2011 = vmatpush1.msra.mxu0 0.0
        %2012 = vmatprep.subr.mxu0 0.0
        %2013 = vmatpush1.msra.mxu0 0.0
        %2014 = vmatprep.subr.mxu0 0.0
        %2015 = vmatpush1.msra.mxu0 0.0
        %2016 = vmatprep.subr.mxu0 0.0
        %2017 = vmatpush1.msra.mxu0 0.0
        %2018 = vmatprep.subr.mxu0 0.0
        %2019 = vmatpush1.msra.mxu0 0.0
        %2020 = vmatprep.subr.mxu0 0.0
        %2021 = vmatpush1.msra.mxu0 0.0
        %2022 = vmatprep.subr.mxu0 0.0
        %2023 = vmatpush1.msra.mxu0 0.0
        %2024 = vmatprep.subr.mxu0 0.0
        %2025 = vmatpush1.msra.mxu0 0.0
        %2026 = vmatprep.subr.mxu0 0.0
        %2027 = vmatpush1.msra.mxu0 0.0
        %2028 = vmatprep.subr.mxu0 0.0
        %2029 = vmatpush1.msra.mxu0 0.0
        %2030 = vmatprep.subr.mxu0 0.0
        %2031 = vmatpush1.msra.mxu0 0.0
        %2032 = vmatprep.subr.mxu0 0.0
        %2033 = vmatpush1.msra.mxu0 0.0
        %2034 = vmatprep.subr.mxu0 0.0
        %2035 = vmatpush1.msra.mxu0 0.0
        %2036 = vmatprep.subr.mxu0 0.0
        %2037 = vmatpush1.msra.mxu0 0.0
        %2038 = vmatprep.mubr.f32.mxu0 0.0
        %2039 = vmatmul.mubr.f32.gmra.mrb[0].mxu0 %v1972
        %v2040 = vpop.f32.mrb[0].mxu0
        %v2041 = vadd.f32 0.0, %v2040
        %v2042 = vpop.f32.mrb[0].mxu0
        %2043 = vdwg.mxu0
        %2045 = vrot.lane.b32.xlu0 %v2041, 24
        %v2046 = vpop.permute.xlu0 %2045
        %vm2048 = vcmask 261312
        %2049 = vst.msk [vmem:[#allocation2] sm:$0xff] %vm2048, %v2046
        %v2050 = vld [vmem:[#allocation2] sm:$0xff]
        %v2052 = vsel %vm497, %v2050, 0
        %2054 = vmatprep.subr.mxu0 0.0
        %2055 = vmatpush1.msra.mxu0 %v488
        %2056 = vmatprep.subr.mxu0 0.0
        %2057 = vmatpush1.msra.mxu0 %v489
        %2058 = vmatprep.subr.mxu0 0.0
        %2059 = vmatpush1.msra.mxu0 %v490
        %2060 = vmatprep.subr.mxu0 0.0
        %2061 = vmatpush1.msra.mxu0 %v491
        %2062 = vmatprep.subr.mxu0 0.0
        %2063 = vmatpush1.msra.mxu0 0.0
        %2064 = vmatprep.subr.mxu0 0.0
        %2065 = vmatpush1.msra.mxu0 0.0
        %2066 = vmatprep.subr.mxu0 0.0
        %2067 = vmatpush1.msra.mxu0 0.0
        %2068 = vmatprep.subr.mxu0 0.0
        %2069 = vmatpush1.msra.mxu0 0.0
        %2070 = vmatprep.subr.mxu0 0.0
        %2071 = vmatpush1.msra.mxu0 0.0
        %2072 = vmatprep.subr.mxu0 0.0
        %2073 = vmatpush1.msra.mxu0 0.0
        %2074 = vmatprep.subr.mxu0 0.0
        %2075 = vmatpush1.msra.mxu0 0.0
        %2076 = vmatprep.subr.mxu0 0.0
        %2077 = vmatpush1.msra.mxu0 0.0
        %2078 = vmatprep.subr.mxu0 0.0
        %2079 = vmatpush1.msra.mxu0 0.0
        %2080 = vmatprep.subr.mxu0 0.0
        %2081 = vmatpush1.msra.mxu0 0.0
        %2082 = vmatprep.subr.mxu0 0.0
        %2083 = vmatpush1.msra.mxu0 0.0
        %2084 = vmatprep.subr.mxu0 0.0
        %2085 = vmatpush1.msra.mxu0 0.0
        %2086 = vmatprep.subr.mxu0 0.0
        %2087 = vmatpush1.msra.mxu0 0.0
        %2088 = vmatprep.subr.mxu0 0.0
        %2089 = vmatpush1.msra.mxu0 0.0
        %2090 = vmatprep.subr.mxu0 0.0
        %2091 = vmatpush1.msra.mxu0 0.0
        %2092 = vmatprep.subr.mxu0 0.0
        %2093 = vmatpush1.msra.mxu0 0.0
        %2094 = vmatprep.subr.mxu0 0.0
        %2095 = vmatpush1.msra.mxu0 0.0
        %2096 = vmatprep.subr.mxu0 0.0
        %2097 = vmatpush1.msra.mxu0 0.0
        %2098 = vmatprep.subr.mxu0 0.0
        %2099 = vmatpush1.msra.mxu0 0.0
        %2100 = vmatprep.subr.mxu0 0.0
        %2101 = vmatpush1.msra.mxu0 0.0
        %2102 = vmatprep.subr.mxu0 0.0
        %2103 = vmatpush1.msra.mxu0 0.0
        %2104 = vmatprep.subr.mxu0 0.0
        %2105 = vmatpush1.msra.mxu0 0.0
        %2106 = vmatprep.subr.mxu0 0.0
        %2107 = vmatpush1.msra.mxu0 0.0
        %2108 = vmatprep.subr.mxu0 0.0
        %2109 = vmatpush1.msra.mxu0 0.0
        %2110 = vmatprep.subr.mxu0 0.0
        %2111 = vmatpush1.msra.mxu0 0.0
        %2112 = vmatprep.subr.mxu0 0.0
        %2113 = vmatpush1.msra.mxu0 0.0
        %2114 = vmatprep.subr.mxu0 0.0
        %2115 = vmatpush1.msra.mxu0 0.0
        %2116 = vmatprep.subr.mxu0 0.0
        %2117 = vmatpush1.msra.mxu0 0.0
        %2118 = vmatprep.mubr.f32.mxu0 0.0
        %2119 = vmatmul.mubr.f32.gmra.mrb[0].mxu0 %v2052
        %v2120 = vpop.f32.mrb[0].mxu0
        %v2121 = vadd.f32 0.0, %v2120
        %v2122 = vpop.f32.mrb[0].mxu0
        %2123 = vdwg.mxu0
        %2124 = vst.msk [vmem:[%s468] sm:$0xff] %vm497, %v2121
        %s2125 = sand.u32 %s237, 1
        %s2126 = scalar_lea.sflag [#allocation5], %s2125
        %s2127 = sand.u32 %s237, 1
        %s2128 = smul.addr %s2127, 8
        %s2129 = scalar_lea.vmem [#allocation15], %s2128
        // Predicated region
        $region81: #{multi_head_seq_attention.1} parent=51 // pred_check
          %p2130 = pneg %p247
        $region82: #{multi_head_seq_attention.1} parent=51 // pred_check_branch
          %2132 = sbr.rel (%p2130) target = $region84
        $region83: #{multi_head_seq_attention.1} parent=51 // pred_region
          %s2134 = ssub.s32 128, 128
          %2135 = vsyncadd %s2126, %s2134
          %s2136 = sadd.s32 %s35, %s34
          %s2137 = smul.addr %s2136, 128
          %s2138 = scalar_lea.hbm %s8, %s2137
          %s2140 = sshll.u32 %s2129, 4
          %s2141 = int_to_ptr.vmem [resolvable:$true] %s2140
          %2143 = dma.vmem_to_hbm [thread:$0]  %s2141, 128, %s2138, %s2126
        $region84: #{multi_head_seq_attention.1} parent=51 // pred_fallthru
          _
      $region52: #{multi_head_seq_attention.1} parent=5 // pred_fallthru
        _
      %p2144 = scmp.le.s32.totalorder 2, %s25
      // Predicated region
      $region85: #{multi_head_seq_attention.1} parent=5 // pred_check
        %p2145 = pneg %p2144
      $region86: #{multi_head_seq_attention.1} parent=5 // pred_check_branch
        %2147 = sbr.rel (%p2145) target = $region88
      $region87: #{multi_head_seq_attention.1} parent=5 // pred_region
        %s2148 = ssub.s32 %s25, 2
        // Predicated region
        $region89: #{multi_head_seq_attention.1} parent=87 // pred_check
          %p2149 = pneg %p253
        $region90: #{multi_head_seq_attention.1} parent=87 // pred_check_branch
          %2151 = sbr.rel (%p2149) target = $region92
        $region91: #{multi_head_seq_attention.1} parent=87 // pred_region
          %s2152 = sand.u32 %s238, 1
          %s2153 = scalar_lea.sflag [#allocation5], %s2152
          %s2154 = sand.u32 %s238, 1
          %s2155 = smul.addr %s2154, 8
          %s2156 = scalar_lea.vmem [#allocation15], %s2155
          %2157 = dma.done %s2153, 128
        $region92: #{multi_head_seq_attention.1} parent=87 // pred_fallthru
          _
      $region88: #{multi_head_seq_attention.1} parent=5 // pred_fallthru
        _
    $region6: #{multi_head_seq_attention.1} parent=1 // loop_footer
      %s29 = sadd.s32 1, %s25
    $region7: #{multi_head_seq_attention.1} parent=1 // loop_footer_branch
      %24 = sbr.rel target = $region3
    $region8: #{multi_head_seq_attention.1} parent=1 // loop_exit
      _
    %2158 = vsyncpa [#allocation4], 1
    %s2159 = scalar_lea.sflag [#allocation4], 1
    %2160 = vsyncpa %s2159, 1
    %2161 = vsyncpa [#allocation7], 1
    %s2162 = scalar_lea.sflag [#allocation7], 1
    %2163 = vsyncpa %s2162, 1
    %2164 = vsyncpa [#allocation10], 1
    %2165 = vsyncpa [#allocation13], 1
    %2166 = vsyncpa [#allocation5], 1
    %s2167 = scalar_lea.sflag [#allocation5], 1
    %2168 = vsyncpa %s2167, 1

</llo_original>
